<compile_context>
chip_gen: v7x
topology: tpu7x:2x2x1
jax: 0.10.0
libtpu: 0.0.40
codegen_flags: <defaults>
</compile_context>

<pallas_src>
import jax
import jax.numpy as jnp
from jax.experimental import pallas as pl
from jax.experimental.pallas import tpu as pltpu

CONV_K = 8      # conv_kernel_size
POOL_K = 4      # pool_kernel_size (== stride)
C_IN = 4
C_OUT = 320
BN_EPS = 1e-5
MM_DTYPE = jnp.bfloat16   # matmul operand dtype (f32 accumulation everywhere)


def _round_up(a, m):
    return (a + m - 1) // m * m


# --------------------------------------------------------------------------
# Fused kernel: one grid step handles a tile of `bt` samples end-to-end.
# --------------------------------------------------------------------------
def _fused_kernel(x_ref, w_ref, cp_ref, w1_ref, fp_ref, w2_ref, o_ref):
    # x_ref : (1, POOL_K*P*bt, 32)  bf16  im2col patches, rows ordered
    #                                      (pool offset q, pooled pos i, sample j)
    # w_ref : (32, C_OUT)           bf16  conv weight (rows = k*C_IN + c)
    # cp_ref: (3, C_OUT)            f32   [conv bias, bn1 scale, bn1 shift]
    # w1_ref: (P, C_OUT, NT)        bf16  fc1 weight, position-major, NT padded
    # fp_ref: (4, NT)               f32   [fc1 bias, bn2 scale, bn2 shift, fc2 bias]
    # w2_ref: (NT, NT)              bf16  fc2 weight (padded)
    # o_ref : (bt, NT)              f32   sigmoid output (padded lanes)
    P = w1_ref.shape[0]
    bt = o_ref.shape[0]

    # ---- 1) Conv1d as ONE matmul over all pool-covered positions ----------
    conv = jnp.dot(x_ref[0], w_ref[...],
                   preferred_element_type=jnp.float32)        # (4*P*bt, 320) f32
    cvec = cp_ref[...]
    conv = jnp.maximum(conv + cvec[0:1, :], 0.0)              # conv bias + ReLU

    # ---- 2) MaxPool1d(4,4): rows are pool-offset-major, so pooling is just
    #         an elementwise max over 4 contiguous row slabs ----------------
    conv = conv.reshape(POOL_K, P * bt, C_OUT)
    pooled = jnp.maximum(jnp.maximum(conv[0], conv[1]),
                         jnp.maximum(conv[2], conv[3]))       # (P*bt, 320)

    # ---- 3) BatchNorm1d(320) eval affine; Dropout identity in eval --------
    pooled = pooled * cvec[1:2, :] + cvec[2:3, :]
    pooled = pooled.astype(MM_DTYPE).reshape(P, bt, C_OUT)    # (P, bt, 320)

    # ---- 4) Linear(320*P -> nt) as a position-blocked K reduction on MXU ---
    h = jnp.dot(pooled[0], w1_ref[0], preferred_element_type=jnp.float32)
    for p in range(1, P):
        h = h + jnp.dot(pooled[p], w1_ref[p],
                        preferred_element_type=jnp.float32)   # (bt, NT) f32

    fvec = fp_ref[...]
    h = jnp.maximum(h + fvec[0:1, :], 0.0)                    # fc1 bias + ReLU
    h = h * fvec[1:2, :] + fvec[2:3, :]                       # BatchNorm1d(nt) eval

    # ---- 5) Linear(nt -> nt) + Sigmoid -------------------------------------
    z = jnp.dot(h.astype(MM_DTYPE), w2_ref[...],
                preferred_element_type=jnp.float32) + fvec[3:4, :]
    o_ref[...] = jax.nn.sigmoid(z)


# --------------------------------------------------------------------------
# Batch tiling policy
# --------------------------------------------------------------------------
def _choose_batch_tiling(N, P):
    # Split the grid only when it helps: large batches (any chip), or tiny
    # batches on a 2-TensorCore chip (v7x). v5e/v6e run the grid serially.
    two_core_chip = False
    try:
        two_core_chip = "7" in jax.devices()[0].device_kind
    except Exception:
        pass

    if N >= 16:
        # Cap the batch tile so per-tile intermediates stay well inside VMEM.
        per_sample = P * (POOL_K * C_OUT * 4            # conv f32 value
                          + POOL_K * CONV_K * C_IN * 4  # patches (double-buffered)
                          + C_OUT * 6)                  # pooled f32 + bf16
        bt_cap = max(8, ((24 * 1024 * 1024) // max(per_sample, 1)) // 8 * 8)
        num_tiles = max(2, pl.cdiv(N, min(128, bt_cap)))
        bt = _round_up(pl.cdiv(N, num_tiles), 8)        # keeps output block (8,128)-aligned
    elif two_core_chip and N >= 2:
        num_tiles, bt = 2, 8
    else:
        num_tiles, bt = 1, max(N, 1)
    return num_tiles, bt


# --------------------------------------------------------------------------
# Wrapper: layout plumbing (im2col, weight packing) + pallas_call
# --------------------------------------------------------------------------
def comp401_forward(x, params):
    N, c_in, L = x.shape
    assert c_in == C_IN
    out_len = L - CONV_K + 1
    pooled_len = (out_len - POOL_K) // POOL_K + 1     # PyTorch MaxPool1d floor mode
    assert pooled_len >= 1, "sequence_length too short for conv+pool"
    P = pooled_len
    rows_used = POOL_K * P                            # conv positions the pool reads
    assert rows_used <= out_len
    n_targets = params["fc2_w"].shape[0]
    nt_pad = max(128, _round_up(n_targets, 128))      # lane-dense classifier width

    num_tiles, bt = _choose_batch_tiling(N, P)
    n_pad = num_tiles * bt
    M = POOL_K * P * bt                               # conv-matmul rows per tile

    # ---- im2col patches built ONCE in the wrapper (tiny input, cheap XLA) ---
    # Column layout: (conv tap k, channel c) -> matches w_conv rows k*C_IN + c.
    # Row layout within a tile: (pool offset q, pooled position i, sample j).
    x_cl = jnp.transpose(x, (0, 2, 1))                                    # (N, L, 4)
    pat = jnp.stack([x_cl[:, k:k + rows_used, :] for k in range(CONV_K)],
                    axis=2)                                               # (N, 4P, 8, 4)
    pat = pat.reshape(N, rows_used, CONV_K * C_IN)                        # (N, 4P, 32)
    if n_pad != N:
        pat = jnp.pad(pat, ((0, n_pad - N), (0, 0), (0, 0)))
    pat = pat.reshape(num_tiles, bt, P, POOL_K, CONV_K * C_IN)
    pat = pat.transpose(0, 3, 2, 1, 4).reshape(num_tiles, M, CONV_K * C_IN)
    patches = pat.astype(MM_DTYPE)

    # ---- conv weight in im2col layout: row = k*C_IN + c ---------------------
    w_conv = (params["conv_w"].transpose(2, 1, 0)
              .reshape(CONV_K * C_IN, C_OUT).astype(MM_DTYPE))

    bn1_scale = params["bn1_gamma"] * jax.lax.rsqrt(params["bn1_var"] + BN_EPS)
    bn1_shift = params["bn1_beta"] - params["bn1_mean"] * bn1_scale
    cp = jnp.stack([params["conv_b"], bn1_scale, bn1_shift],
                   axis=0).astype(jnp.float32)                            # (3, 320)

    # fc1: PyTorch flatten order is channel-major (ch*P + p); make it
    # position-major (p, ch) and pad targets to nt_pad.
    w1 = params["fc1_w"].reshape(C_OUT, P, n_targets).transpose(1, 0, 2)
    w1 = jnp.pad(w1, ((0, 0), (0, 0), (0, nt_pad - n_targets))).astype(MM_DTYPE)

    bn2_scale = params["bn2_gamma"] * jax.lax.rsqrt(params["bn2_var"] + BN_EPS)
    bn2_shift = params["bn2_beta"] - params["bn2_mean"] * bn2_scale

    def _padv(v):
        return jnp.pad(v, (0, nt_pad - n_targets))

    fp = jnp.stack([_padv(params["fc1_b"]), _padv(bn2_scale),
                    _padv(bn2_shift), _padv(params["fc2_b"])],
                   axis=0).astype(jnp.float32)                            # (4, nt_pad)

    w2 = jnp.pad(params["fc2_w"],
                 ((0, nt_pad - n_targets), (0, nt_pad - n_targets))
                 ).astype(MM_DTYPE)                                       # (nt_pad, nt_pad)

    out = pl.pallas_call(
        _fused_kernel,
        out_shape=jax.ShapeDtypeStruct((n_pad, nt_pad), jnp.float32),
        grid=(num_tiles,),
        in_specs=[
            pl.BlockSpec((1, M, CONV_K * C_IN), lambda i: (i, 0, 0)),
            pl.BlockSpec((CONV_K * C_IN, C_OUT), lambda i: (0, 0)),
            pl.BlockSpec((3, C_OUT), lambda i: (0, 0)),
            pl.BlockSpec((P, C_OUT, nt_pad), lambda i: (0, 0, 0)),
            pl.BlockSpec((4, nt_pad), lambda i: (0, 0)),
            pl.BlockSpec((nt_pad, nt_pad), lambda i: (0, 0)),
        ],
        out_specs=pl.BlockSpec((bt, nt_pad), lambda i: (i, 0)),
        compiler_params=pltpu.CompilerParams(
            dimension_semantics=("parallel",),
            vmem_limit_bytes=64 * 1024 * 1024),
    )(patches, w_conv, cp, w1, fp, w2)

    return out[:N, :n_targets]


# --------------------------------------------------------------------------
# Pure-JAX (f32) reference for a sanity check
# --------------------------------------------------------------------------
def reference_forward(x, params):
    N, _, L = x.shape
    out_len = L - CONV_K + 1
    pooled_len = (out_len - POOL_K) // POOL_K + 1
    cols = jnp.stack([x[:, :, k:k + out_len] for k in range(CONV_K)], axis=-1)
    conv = jnp.einsum('nclk,ock->nol', cols, params["conv_w"])
    conv = jnp.maximum(conv + params["conv_b"][None, :, None], 0.0)
    pooled = jnp.max(conv[:, :, :pooled_len * POOL_K]
                     .reshape(N, C_OUT, pooled_len, POOL_K), axis=-1)
    s1 = params["bn1_gamma"] / jnp.sqrt(params["bn1_var"] + BN_EPS)
    t1 = params["bn1_beta"] - params["bn1_mean"] * s1
    pooled = pooled * s1[None, :, None] + t1[None, :, None]
    feat = pooled.reshape(N, C_OUT * pooled_len)
    h = jnp.maximum(feat @ params["fc1_w"] + params["fc1_b"], 0.0)
    s2 = params["bn2_gamma"] / jnp.sqrt(params["bn2_var"] + BN_EPS)
    h = h * s2 + (params["bn2_beta"] - params["bn2_mean"] * s2)
    z = h @ params["fc2_w"] + params["fc2_b"]
    return jax.nn.sigmoid(z)


# --------------------------------------------------------------------------
# Deterministic parameter init (PyTorch-default-style, synthetic)
# --------------------------------------------------------------------------
def init_params(key, sequence_length, n_targets):
    out_len = sequence_length - CONV_K + 1
    pooled_len = (out_len - POOL_K) // POOL_K + 1
    feat_dim = C_OUT * pooled_len

    ks = jax.random.split(key, 6)

    def uniform(k, shape, fan_in):
        bound = 1.0 / jnp.sqrt(jnp.float32(fan_in))
        return jax.random.uniform(k, shape, jnp.float32, -bound, bound)

    return {
        "conv_w": uniform(ks[0], (C_OUT, C_IN, CONV_K), C_IN * CONV_K),
        "conv_b": uniform(ks[1], (C_OUT,), C_IN * CONV_K),
        "bn1_gamma": jnp.ones((C_OUT,), jnp.float32),
        "bn1_beta": jnp.zeros((C_OUT,), jnp.float32),
        "bn1_mean": jnp.zeros((C_OUT,), jnp.float32),
        "bn1_var": jnp.ones((C_OUT,), jnp.float32),
        "fc1_w": uniform(ks[2], (feat_dim, n_targets), feat_dim),   # (in, out)
        "fc1_b": uniform(ks[3], (n_targets,), feat_dim),
        "bn2_gamma": jnp.ones((n_targets,), jnp.float32),
        "bn2_beta": jnp.zeros((n_targets,), jnp.float32),
        "bn2_mean": jnp.zeros((n_targets,), jnp.float32),
        "bn2_var": jnp.ones((n_targets,), jnp.float32),
        "fc2_w": uniform(ks[4], (n_targets, n_targets), n_targets),  # (in, out)
        "fc2_b": uniform(ks[5], (n_targets,), n_targets),
    }


if __name__ == "__main__":
    sequence_length = 32
    n_targets = 16
    batch = 2

    key = jax.random.PRNGKey(0)
    kx, kp = jax.random.split(key)

    x = jax.random.normal(kx, (batch, C_IN, sequence_length), dtype=jnp.float32)
    params = init_params(kp, sequence_length, n_targets)

    y = jax.block_until_ready(comp401_forward(x, params))

    assert y.shape == (batch, n_targets), y.shape
    assert bool(jnp.all(jnp.isfinite(y)))
    assert bool(jnp.all((y >= 0.0) & (y <= 1.0)))  # sigmoid output range

    # sanity check vs pure-JAX f32 reference (bf16 matmul operands -> loose tol)
    y_ref = jax.block_until_ready(reference_forward(x, params))
    err = float(jnp.max(jnp.abs(y - y_ref)))
    assert err < 5e-2, err

    print("KERNEL_OK")
</pallas_src>

<mosaic_0001>
module attributes {stable_mosaic.version = 11 : i64} {
  func.func @_fused_kernel(%arg0: i32, %arg1: memref<1x48x32xbf16, #tpu.memory_space<vmem>>, %arg2: memref<32x320xbf16, #tpu.memory_space<vmem>>, %arg3: memref<3x320xf32, #tpu.memory_space<vmem>>, %arg4: memref<6x320x128xbf16, #tpu.memory_space<vmem>>, %arg5: memref<4x128xf32, #tpu.memory_space<vmem>>, %arg6: memref<128x128xbf16, #tpu.memory_space<vmem>>, %arg7: memref<2x128xf32, #tpu.memory_space<vmem>>) attributes {dimension_semantics = [#tpu.dimension_semantics<parallel>], iteration_bounds = array<i64: 1>, scalar_prefetch = 0 : i64, scratch_operands = 0 : i64, tpu.core_type = #tpu.core_type<tc>, window_params = [{transform_indices = @transform_0, window_bounds = array<i64: 1, 48, 32>}, {pipeline_mode = #tpu.pipeline_mode<synchronous>, transform_indices = @transform_1, window_bounds = array<i64: 32, 320>}, {pipeline_mode = #tpu.pipeline_mode<synchronous>, transform_indices = @transform_2, window_bounds = array<i64: 3, 320>}, {pipeline_mode = #tpu.pipeline_mode<synchronous>, transform_indices = @transform_3, window_bounds = array<i64: 6, 320, 128>}, {pipeline_mode = #tpu.pipeline_mode<synchronous>, transform_indices = @transform_4, window_bounds = array<i64: 4, 128>}, {pipeline_mode = #tpu.pipeline_mode<synchronous>, transform_indices = @transform_5, window_bounds = array<i64: 128, 128>}, {transform_indices = @transform_6, window_bounds = array<i64: 2, 128>}]} {
    %c0 = arith.constant 0 : index
    %c0_0 = arith.constant 0 : index
    %c0_1 = arith.constant 0 : index
    %0 = vector.load %arg1[%c0, %c0_0, %c0_1] : memref<1x48x32xbf16, #tpu.memory_space<vmem>>, vector<1x48x32xbf16>
    %1 = vector.shape_cast %0 : vector<1x48x32xbf16> to vector<48x32xbf16>
    %c0_2 = arith.constant 0 : index
    %c0_3 = arith.constant 0 : index
    %2 = vector.load %arg2[%c0_2, %c0_3] : memref<32x320xbf16, #tpu.memory_space<vmem>>, vector<32x320xbf16>
    %cst = arith.constant dense<0.000000e+00> : vector<48x320xf32>
    %3 = tpu.matmul %1, %2, %cst {dimension_numbers = #tpu.dot_dimension_numbers<[1], [0], [0], [1], [0, 0, 1, 1], [], []>} : vector<48x32xbf16>, vector<32x320xbf16>, vector<48x320xf32> -> vector<48x320xf32>
    %c0_4 = arith.constant 0 : index
    %c0_5 = arith.constant 0 : index
    %4 = vector.load %arg3[%c0_4, %c0_5] : memref<3x320xf32, #tpu.memory_space<vmem>>, vector<3x320xf32>
    %5 = vector.extract_strided_slice %4 {offsets = [0, 0], sizes = [1, 320], strides = [1, 1]} : vector<3x320xf32> to vector<1x320xf32>
    %6 = vector.broadcast %5 : vector<1x320xf32> to vector<48x320xf32>
    %7 = arith.addf %3, %6 : vector<48x320xf32>
    %cst_6 = arith.constant 0.000000e+00 : f32
    %8 = vector.broadcast %cst_6 : f32 to vector<48x320xf32>
    %9 = arith.maximumf %7, %8 : vector<48x320xf32>
    %10 = vector.shape_cast %9 : vector<48x320xf32> to vector<4x12x320xf32>
    %11 = vector.extract_strided_slice %10 {offsets = [0, 0, 0], sizes = [1, 12, 320], strides = [1, 1, 1]} : vector<4x12x320xf32> to vector<1x12x320xf32>
    %12 = vector.shape_cast %11 : vector<1x12x320xf32> to vector<12x320xf32>
    %13 = vector.extract_strided_slice %10 {offsets = [1, 0, 0], sizes = [1, 12, 320], strides = [1, 1, 1]} : vector<4x12x320xf32> to vector<1x12x320xf32>
    %14 = vector.shape_cast %13 : vector<1x12x320xf32> to vector<12x320xf32>
    %15 = arith.maximumf %12, %14 : vector<12x320xf32>
    %16 = vector.extract_strided_slice %10 {offsets = [2, 0, 0], sizes = [1, 12, 320], strides = [1, 1, 1]} : vector<4x12x320xf32> to vector<1x12x320xf32>
    %17 = vector.shape_cast %16 : vector<1x12x320xf32> to vector<12x320xf32>
    %18 = vector.extract_strided_slice %10 {offsets = [3, 0, 0], sizes = [1, 12, 320], strides = [1, 1, 1]} : vector<4x12x320xf32> to vector<1x12x320xf32>
    %19 = vector.shape_cast %18 : vector<1x12x320xf32> to vector<12x320xf32>
    %20 = arith.maximumf %17, %19 : vector<12x320xf32>
    %21 = arith.maximumf %15, %20 : vector<12x320xf32>
    %22 = vector.extract_strided_slice %4 {offsets = [1, 0], sizes = [1, 320], strides = [1, 1]} : vector<3x320xf32> to vector<1x320xf32>
    %23 = vector.broadcast %22 : vector<1x320xf32> to vector<12x320xf32>
    %24 = arith.mulf %21, %23 : vector<12x320xf32>
    %25 = vector.extract_strided_slice %4 {offsets = [2, 0], sizes = [1, 320], strides = [1, 1]} : vector<3x320xf32> to vector<1x320xf32>
    %26 = vector.broadcast %25 : vector<1x320xf32> to vector<12x320xf32>
    %27 = arith.addf %24, %26 : vector<12x320xf32>
    %28 = arith.truncf %27 : vector<12x320xf32> to vector<12x320xbf16>
    %29 = vector.shape_cast %28 : vector<12x320xbf16> to vector<6x2x320xbf16>
    %30 = vector.extract_strided_slice %29 {offsets = [0, 0, 0], sizes = [1, 2, 320], strides = [1, 1, 1]} : vector<6x2x320xbf16> to vector<1x2x320xbf16>
    %31 = vector.shape_cast %30 : vector<1x2x320xbf16> to vector<2x320xbf16>
    %c0_7 = arith.constant 0 : index
    %c0_8 = arith.constant 0 : index
    %c0_9 = arith.constant 0 : index
    %32 = vector.load %arg4[%c0_7, %c0_8, %c0_9] : memref<6x320x128xbf16, #tpu.memory_space<vmem>>, vector<1x320x128xbf16>
    %33 = vector.shape_cast %32 : vector<1x320x128xbf16> to vector<320x128xbf16>
    %cst_10 = arith.constant dense<0.000000e+00> : vector<2x128xf32>
    %34 = tpu.matmul %31, %33, %cst_10 {dimension_numbers = #tpu.dot_dimension_numbers<[1], [0], [0], [1], [0, 0, 1, 1], [], []>} : vector<2x320xbf16>, vector<320x128xbf16>, vector<2x128xf32> -> vector<2x128xf32>
    %35 = vector.extract_strided_slice %29 {offsets = [1, 0, 0], sizes = [1, 2, 320], strides = [1, 1, 1]} : vector<6x2x320xbf16> to vector<1x2x320xbf16>
    %36 = vector.shape_cast %35 : vector<1x2x320xbf16> to vector<2x320xbf16>
    %c1 = arith.constant 1 : index
    %c0_11 = arith.constant 0 : index
    %c0_12 = arith.constant 0 : index
    %37 = vector.load %arg4[%c1, %c0_11, %c0_12] : memref<6x320x128xbf16, #tpu.memory_space<vmem>>, vector<1x320x128xbf16>
    %38 = vector.shape_cast %37 : vector<1x320x128xbf16> to vector<320x128xbf16>
    %cst_13 = arith.constant dense<0.000000e+00> : vector<2x128xf32>
    %39 = tpu.matmul %36, %38, %cst_13 {dimension_numbers = #tpu.dot_dimension_numbers<[1], [0], [0], [1], [0, 0, 1, 1], [], []>} : vector<2x320xbf16>, vector<320x128xbf16>, vector<2x128xf32> -> vector<2x128xf32>
    %40 = arith.addf %34, %39 : vector<2x128xf32>
    %41 = vector.extract_strided_slice %29 {offsets = [2, 0, 0], sizes = [1, 2, 320], strides = [1, 1, 1]} : vector<6x2x320xbf16> to vector<1x2x320xbf16>
    %42 = vector.shape_cast %41 : vector<1x2x320xbf16> to vector<2x320xbf16>
    %c2 = arith.constant 2 : index
    %c0_14 = arith.constant 0 : index
    %c0_15 = arith.constant 0 : index
    %43 = vector.load %arg4[%c2, %c0_14, %c0_15] : memref<6x320x128xbf16, #tpu.memory_space<vmem>>, vector<1x320x128xbf16>
    %44 = vector.shape_cast %43 : vector<1x320x128xbf16> to vector<320x128xbf16>
    %cst_16 = arith.constant dense<0.000000e+00> : vector<2x128xf32>
    %45 = tpu.matmul %42, %44, %cst_16 {dimension_numbers = #tpu.dot_dimension_numbers<[1], [0], [0], [1], [0, 0, 1, 1], [], []>} : vector<2x320xbf16>, vector<320x128xbf16>, vector<2x128xf32> -> vector<2x128xf32>
    %46 = arith.addf %40, %45 : vector<2x128xf32>
    %47 = vector.extract_strided_slice %29 {offsets = [3, 0, 0], sizes = [1, 2, 320], strides = [1, 1, 1]} : vector<6x2x320xbf16> to vector<1x2x320xbf16>
    %48 = vector.shape_cast %47 : vector<1x2x320xbf16> to vector<2x320xbf16>
    %c3 = arith.constant 3 : index
    %c0_17 = arith.constant 0 : index
    %c0_18 = arith.constant 0 : index
    %49 = vector.load %arg4[%c3, %c0_17, %c0_18] : memref<6x320x128xbf16, #tpu.memory_space<vmem>>, vector<1x320x128xbf16>
    %50 = vector.shape_cast %49 : vector<1x320x128xbf16> to vector<320x128xbf16>
    %cst_19 = arith.constant dense<0.000000e+00> : vector<2x128xf32>
    %51 = tpu.matmul %48, %50, %cst_19 {dimension_numbers = #tpu.dot_dimension_numbers<[1], [0], [0], [1], [0, 0, 1, 1], [], []>} : vector<2x320xbf16>, vector<320x128xbf16>, vector<2x128xf32> -> vector<2x128xf32>
    %52 = arith.addf %46, %51 : vector<2x128xf32>
    %53 = vector.extract_strided_slice %29 {offsets = [4, 0, 0], sizes = [1, 2, 320], strides = [1, 1, 1]} : vector<6x2x320xbf16> to vector<1x2x320xbf16>
    %54 = vector.shape_cast %53 : vector<1x2x320xbf16> to vector<2x320xbf16>
    %c4 = arith.constant 4 : index
    %c0_20 = arith.constant 0 : index
    %c0_21 = arith.constant 0 : index
    %55 = vector.load %arg4[%c4, %c0_20, %c0_21] : memref<6x320x128xbf16, #tpu.memory_space<vmem>>, vector<1x320x128xbf16>
    %56 = vector.shape_cast %55 : vector<1x320x128xbf16> to vector<320x128xbf16>
    %cst_22 = arith.constant dense<0.000000e+00> : vector<2x128xf32>
    %57 = tpu.matmul %54, %56, %cst_22 {dimension_numbers = #tpu.dot_dimension_numbers<[1], [0], [0], [1], [0, 0, 1, 1], [], []>} : vector<2x320xbf16>, vector<320x128xbf16>, vector<2x128xf32> -> vector<2x128xf32>
    %58 = arith.addf %52, %57 : vector<2x128xf32>
    %59 = vector.extract_strided_slice %29 {offsets = [5, 0, 0], sizes = [1, 2, 320], strides = [1, 1, 1]} : vector<6x2x320xbf16> to vector<1x2x320xbf16>
    %60 = vector.shape_cast %59 : vector<1x2x320xbf16> to vector<2x320xbf16>
    %c5 = arith.constant 5 : index
    %c0_23 = arith.constant 0 : index
    %c0_24 = arith.constant 0 : index
    %61 = vector.load %arg4[%c5, %c0_23, %c0_24] : memref<6x320x128xbf16, #tpu.memory_space<vmem>>, vector<1x320x128xbf16>
    %62 = vector.shape_cast %61 : vector<1x320x128xbf16> to vector<320x128xbf16>
    %cst_25 = arith.constant dense<0.000000e+00> : vector<2x128xf32>
    %63 = tpu.matmul %60, %62, %cst_25 {dimension_numbers = #tpu.dot_dimension_numbers<[1], [0], [0], [1], [0, 0, 1, 1], [], []>} : vector<2x320xbf16>, vector<320x128xbf16>, vector<2x128xf32> -> vector<2x128xf32>
    %64 = arith.addf %58, %63 : vector<2x128xf32>
    %c0_26 = arith.constant 0 : index
    %c0_27 = arith.constant 0 : index
    %65 = vector.load %arg5[%c0_26, %c0_27] : memref<4x128xf32, #tpu.memory_space<vmem>>, vector<4x128xf32>
    %66 = vector.extract_strided_slice %65 {offsets = [0, 0], sizes = [1, 128], strides = [1, 1]} : vector<4x128xf32> to vector<1x128xf32>
    %67 = vector.broadcast %66 : vector<1x128xf32> to vector<2x128xf32>
    %68 = arith.addf %64, %67 : vector<2x128xf32>
    %cst_28 = arith.constant 0.000000e+00 : f32
    %69 = vector.broadcast %cst_28 : f32 to vector<2x128xf32>
    %70 = arith.maximumf %68, %69 : vector<2x128xf32>
    %71 = vector.extract_strided_slice %65 {offsets = [1, 0], sizes = [1, 128], strides = [1, 1]} : vector<4x128xf32> to vector<1x128xf32>
    %72 = vector.broadcast %71 : vector<1x128xf32> to vector<2x128xf32>
    %73 = arith.mulf %70, %72 : vector<2x128xf32>
    %74 = vector.extract_strided_slice %65 {offsets = [2, 0], sizes = [1, 128], strides = [1, 1]} : vector<4x128xf32> to vector<1x128xf32>
    %75 = vector.broadcast %74 : vector<1x128xf32> to vector<2x128xf32>
    %76 = arith.addf %73, %75 : vector<2x128xf32>
    %77 = arith.truncf %76 : vector<2x128xf32> to vector<2x128xbf16>
    %c0_29 = arith.constant 0 : index
    %c0_30 = arith.constant 0 : index
    %78 = vector.load %arg6[%c0_29, %c0_30] : memref<128x128xbf16, #tpu.memory_space<vmem>>, vector<128x128xbf16>
    %cst_31 = arith.constant dense<0.000000e+00> : vector<2x128xf32>
    %79 = tpu.matmul %77, %78, %cst_31 {dimension_numbers = #tpu.dot_dimension_numbers<[1], [0], [0], [1], [0, 0, 1, 1], [], []>} : vector<2x128xbf16>, vector<128x128xbf16>, vector<2x128xf32> -> vector<2x128xf32>
    %80 = vector.extract_strided_slice %65 {offsets = [3, 0], sizes = [1, 128], strides = [1, 1]} : vector<4x128xf32> to vector<1x128xf32>
    %81 = vector.broadcast %80 : vector<1x128xf32> to vector<2x128xf32>
    %82 = arith.addf %79, %81 : vector<2x128xf32>
    %83 = arith.negf %82 : vector<2x128xf32>
    %84 = math.exp %83 : vector<2x128xf32>
    %cst_32 = arith.constant 1.000000e+00 : f32
    %85 = vector.broadcast %cst_32 : f32 to vector<2x128xf32>
    %86 = arith.addf %85, %84 : vector<2x128xf32>
    %87 = arith.divf %85, %86 : vector<2x128xf32>
    %c0_33 = arith.constant 0 : index
    %c0_34 = arith.constant 0 : index
    %88 = vector.load %arg7[%c0_33, %c0_34] : memref<2x128xf32, #tpu.memory_space<vmem>>, vector<2x128xf32>
    tpu.vector_store %arg7[%c0_33, %c0_34], %87 {strides = array<i32>} : memref<2x128xf32, #tpu.memory_space<vmem>>, vector<2x128xf32>,
    return
  }
  func.func @transform_0(%arg0: i32) -> (i32, i32, i32) {
    %c0_i32 = arith.constant 0 : i32
    %c0_i32_0 = arith.constant 0 : i32
    %c0_i32_1 = arith.constant 0 : i32
    return %arg0, %c0_i32, %c0_i32_0 : i32, i32, i32
  }
  func.func @transform_1(%arg0: i32) -> (i32, i32) {
    %c0_i32 = arith.constant 0 : i32
    %c0_i32_0 = arith.constant 0 : i32
    %c0_i32_1 = arith.constant 0 : i32
    return %c0_i32, %c0_i32_0 : i32, i32
  }
  func.func @transform_2(%arg0: i32) -> (i32, i32) {
    %c0_i32 = arith.constant 0 : i32
    %c0_i32_0 = arith.constant 0 : i32
    %c0_i32_1 = arith.constant 0 : i32
    return %c0_i32, %c0_i32_0 : i32, i32
  }
  func.func @transform_3(%arg0: i32) -> (i32, i32, i32) {
    %c0_i32 = arith.constant 0 : i32
    %c0_i32_0 = arith.constant 0 : i32
    %c0_i32_1 = arith.constant 0 : i32
    %c0_i32_2 = arith.constant 0 : i32
    return %c0_i32, %c0_i32_0, %c0_i32_1 : i32, i32, i32
  }
  func.func @transform_4(%arg0: i32) -> (i32, i32) {
    %c0_i32 = arith.constant 0 : i32
    %c0_i32_0 = arith.constant 0 : i32
    %c0_i32_1 = arith.constant 0 : i32
    return %c0_i32, %c0_i32_0 : i32, i32
  }
  func.func @transform_5(%arg0: i32) -> (i32, i32) {
    %c0_i32 = arith.constant 0 : i32
    %c0_i32_0 = arith.constant 0 : i32
    %c0_i32_1 = arith.constant 0 : i32
    return %c0_i32, %c0_i32_0 : i32, i32
  }
  func.func @transform_6(%arg0: i32) -> (i32, i32) {
    %c0_i32 = arith.constant 0 : i32
    %c0_i32_0 = arith.constant 0 : i32
    return %arg0, %c0_i32 : i32, i32
  }
}

</mosaic_0001>

<llo_original>
// kernel: tpu_custom_call.1
$region0: #{tpu_custom_call.1}
  #allocation0 [shape = 'u32[]', space=smem, size = 0x4, offset = 0x4, fixed_abs, tag = 'smem constant byte address 0x4 - core index']
  #allocation1 [shape = 'u32[144,128]{1,0:T(1,128)}', space=vmem, size = 0x12000, scoped, tag = 'internal scratch']
  %s0 = inlined_call_operand.hbm [shape: bf16[1,48,32], index: 0, kind: input, shape index: {}]
  %s1 = inlined_call_operand.hbm [shape: bf16[32,320], index: 1, kind: input, shape index: {}]
  %s2 = inlined_call_operand.hbm [shape: f32[3,320], index: 2, kind: input, shape index: {}]
  %s3 = inlined_call_operand.hbm [shape: bf16[6,320,128], index: 3, kind: input, shape index: {}]
  %s4 = inlined_call_operand.hbm [shape: f32[4,128], index: 4, kind: input, shape index: {}]
  %s5 = inlined_call_operand.hbm [shape: bf16[128,128], index: 5, kind: input, shape index: {}]
  %s6 = inlined_call_operand.hbm [shape: f32[2,128], index: 6, kind: output, shape index: {}]
  %s7 = sld [smem:[#allocation0]]
  $region58: #{tpu_custom_call.1} parent=0
    _
  %s9 = ssub.s32 1, %s7
  %s10 = scalar_select 0, %s9, %s7
  $region1: #{tpu_custom_call.1} parent=0
    #allocation2 [shape = 'u8[12288]{0}', space=vmem, size = 0x3000, scoped, tag = 'input window, operand 0, single buffered']
    #allocation3 [shape = 's32[1]{0}', space=sflag, size = 0x4, scoped, tag = 'scoped memory for tpu_custom_call.1']
    #allocation4 [shape = 's32[1]{0}', space=sflag, size = 0x4, scoped, tag = 'scoped memory for tpu_custom_call.1']
    #allocation5 [shape = 'u8[24576]{0}', space=vmem, size = 0x6000, scoped, tag = 'input window, operand 1, single buffered']
    #allocation6 [shape = 's32[1]{0}', space=sflag, size = 0x4, scoped, tag = 'scoped memory for tpu_custom_call.1']
    #allocation7 [shape = 'u8[6144]{0}', space=vmem, size = 0x1800, scoped, tag = 'input window, operand 2, single buffered']
    #allocation8 [shape = 'u8[491520]{0}', space=vmem, size = 0x78000, scoped, tag = 'input window, operand 3, single buffered']
    #allocation9 [shape = 's32[1]{0}', space=sflag, size = 0x4, scoped, tag = 'scoped memory for tpu_custom_call.1']
    #allocation10 [shape = 'u8[2048]{0}', space=vmem, size = 0x800, scoped, tag = 'input window, operand 4, single buffered']
    #allocation11 [shape = 'u8[32768]{0}', space=vmem, size = 0x8000, scoped, tag = 'input window, operand 5, single buffered']
    #allocation12 [shape = 's32[1]{0}', space=sflag, size = 0x4, scoped, tag = 'scoped memory for tpu_custom_call.1']
    #allocation13 [shape = 'u8[1024]{0}', space=vmem, size = 0x400, scoped, tag = 'output window, operand 0, single buffered']
    %11 = vsyncpa [#allocation3], 0
    %12 = vsyncpa [#allocation6], 0
    %13 = vsyncpa [#allocation9], 0
    %14 = vsyncpa [#allocation12], 0
    %15 = vsyncpa [#allocation4], 0
    // Predicated region
    $region2: #{tpu_custom_call.1} parent=1 // pred_check
      _
    $region3: #{tpu_custom_call.1} parent=1 // pred_check_branch
      %17 = sbr.rel (0) target = $region5
    $region4: #{tpu_custom_call.1} parent=1 // pred_region
      %s19 = ssub.s32 384, 384
      %20 = vsyncadd [#allocation3], %s19
      %s21 = sshll.u32 [#allocation2], 4
      %s22 = int_to_ptr.vmem [resolvable:$true] %s21
      %27 = dma.hbm_to_vmem [thread:$0]  %s0, 384, %s22, [#allocation3], 64, 64, 4
    $region5: #{tpu_custom_call.1} parent=1 // pred_fallthru
      _
    // Predicated region
    $region6: #{tpu_custom_call.1} parent=1 // pred_check
      _
    $region7: #{tpu_custom_call.1} parent=1 // pred_check_branch
      %29 = sbr.rel (0) target = $region9
    $region8: #{tpu_custom_call.1} parent=1 // pred_region
      %s31 = ssub.s32 768, 768
      %32 = vsyncadd [#allocation6], %s31
      %s33 = sshll.u32 [#allocation5], 4
      %s34 = int_to_ptr.vmem [resolvable:$true] %s33
      %39 = dma.hbm_to_vmem [thread:$0]  %s1, 768, %s34, [#allocation6], 192, 192, 12
    $region9: #{tpu_custom_call.1} parent=1 // pred_fallthru
      _
    // Predicated region
    $region10: #{tpu_custom_call.1} parent=1 // pred_check
      _
    $region11: #{tpu_custom_call.1} parent=1 // pred_check_branch
      %41 = sbr.rel (0) target = $region13
    $region12: #{tpu_custom_call.1} parent=1 // pred_region
      %s43 = ssub.s32 192, 192
      %44 = vsyncadd [#allocation6], %s43
      %s46 = sshll.u32 [#allocation7], 4
      %s47 = int_to_ptr.vmem [resolvable:$true] %s46
      %49 = dma.hbm_to_vmem [thread:$0]  %s2, 192, %s47, [#allocation6]
    $region13: #{tpu_custom_call.1} parent=1 // pred_fallthru
      _
    // Predicated region
    $region14: #{tpu_custom_call.1} parent=1 // pred_check
      _
    $region15: #{tpu_custom_call.1} parent=1 // pred_check_branch
      %51 = sbr.rel (0) target = $region17
    $region16: #{tpu_custom_call.1} parent=1 // pred_region
      %s53 = ssub.s32 15360, 15360
      %54 = vsyncadd [#allocation9], %s53
      %s55 = sshll.u32 [#allocation8], 4
      %s56 = int_to_ptr.vmem [resolvable:$true] %s55
      %61 = dma.hbm_to_vmem [thread:$0]  %s3, 15360, %s56, [#allocation9], 64, 64, 4
    $region17: #{tpu_custom_call.1} parent=1 // pred_fallthru
      _
    // Predicated region
    $region18: #{tpu_custom_call.1} parent=1 // pred_check
      _
    $region19: #{tpu_custom_call.1} parent=1 // pred_check_branch
      %63 = sbr.rel (0) target = $region21
    $region20: #{tpu_custom_call.1} parent=1 // pred_region
      %s65 = ssub.s32 64, 64
      %66 = vsyncadd [#allocation9], %s65
      %s68 = sshll.u32 [#allocation10], 4
      %s69 = int_to_ptr.vmem [resolvable:$true] %s68
      %71 = dma.hbm_to_vmem [thread:$0]  %s4, 64, %s69, [#allocation9]
    $region21: #{tpu_custom_call.1} parent=1 // pred_fallthru
      _
    // Predicated region
    $region22: #{tpu_custom_call.1} parent=1 // pred_check
      _
    $region23: #{tpu_custom_call.1} parent=1 // pred_check_branch
      %73 = sbr.rel (0) target = $region25
    $region24: #{tpu_custom_call.1} parent=1 // pred_region
      %s75 = ssub.s32 1024, 1024
      %76 = vsyncadd [#allocation12], %s75
      %s77 = sshll.u32 [#allocation11], 4
      %s78 = int_to_ptr.vmem [resolvable:$true] %s77
      %83 = dma.hbm_to_vmem [thread:$0]  %s5, 1024, %s78, [#allocation12], 64, 64, 4
    $region25: #{tpu_custom_call.1} parent=1 // pred_fallthru
      _
    // Predicated region
    $region26: #{tpu_custom_call.1} parent=1 // pred_check
      _
    $region27: #{tpu_custom_call.1} parent=1 // pred_check_branch
      %85 = sbr.rel (0) target = $region29
    $region28: #{tpu_custom_call.1} parent=1 // pred_region
      %86 = dma.done [#allocation3], 384
    $region29: #{tpu_custom_call.1} parent=1 // pred_fallthru
      _
    // Predicated region
    $region30: #{tpu_custom_call.1} parent=1 // pred_check
      _
    $region31: #{tpu_custom_call.1} parent=1 // pred_check_branch
      %88 = sbr.rel (0) target = $region33
    $region32: #{tpu_custom_call.1} parent=1 // pred_region
      %89 = dma.done [#allocation6], 768
    $region33: #{tpu_custom_call.1} parent=1 // pred_fallthru
      _
    // Predicated region
    $region34: #{tpu_custom_call.1} parent=1 // pred_check
      _
    $region35: #{tpu_custom_call.1} parent=1 // pred_check_branch
      %91 = sbr.rel (0) target = $region37
    $region36: #{tpu_custom_call.1} parent=1 // pred_region
      %92 = dma.done [#allocation6], 192
    $region37: #{tpu_custom_call.1} parent=1 // pred_fallthru
      _
    // Predicated region
    $region38: #{tpu_custom_call.1} parent=1 // pred_check
      _
    $region39: #{tpu_custom_call.1} parent=1 // pred_check_branch
      %94 = sbr.rel (0) target = $region41
    $region40: #{tpu_custom_call.1} parent=1 // pred_region
      %95 = dma.done [#allocation9], 15360
    $region41: #{tpu_custom_call.1} parent=1 // pred_fallthru
      _
    // Predicated region
    $region42: #{tpu_custom_call.1} parent=1 // pred_check
      _
    $region43: #{tpu_custom_call.1} parent=1 // pred_check_branch
      %97 = sbr.rel (0) target = $region45
    $region44: #{tpu_custom_call.1} parent=1 // pred_region
      %98 = dma.done [#allocation9], 64
    $region45: #{tpu_custom_call.1} parent=1 // pred_fallthru
      _
    // Predicated region
    $region46: #{tpu_custom_call.1} parent=1 // pred_check
      _
    $region47: #{tpu_custom_call.1} parent=1 // pred_check_branch
      %100 = sbr.rel (0) target = $region49
    $region48: #{tpu_custom_call.1} parent=1 // pred_region
      %101 = dma.done [#allocation12], 1024
    $region49: #{tpu_custom_call.1} parent=1 // pred_fallthru
      _
    %v103 = vld [vmem:[#allocation2] sm:$0xf]
    %v104 = vld [vmem:[#allocation2 + $0x4] sm:$0xf]
    %v105 = vld [vmem:[#allocation2 + $0x8] sm:$0xf]
    %v106 = vld [vmem:[#allocation2 + $0xc] sm:$0xf]
    %v107 = vld [vmem:[#allocation2 + $0x10] sm:$0xf]
    %v108 = vld [vmem:[#allocation2 + $0x14] sm:$0xf]
    %v109 = vld [vmem:[#allocation5] sm:$0xff]
    %v110 = vld [vmem:[#allocation5 + $0x8] sm:$0xf]
    %v111 = vld [vmem:[#allocation5 + $0xc] sm:$0xff]
    %v112 = vld [vmem:[#allocation5 + $0x14] sm:$0xf]
    %v113 = vld [vmem:[#allocation5 + $0x18] sm:$0xff]
    %v114 = vld [vmem:[#allocation5 + $0x20] sm:$0xf]
    %v115 = vld [vmem:[#allocation5 + $0x24] sm:$0xff]
    %v116 = vld [vmem:[#allocation5 + $0x2c] sm:$0xf]
    %v117 = vld [vmem:[#allocation7] sm:$0x77]
    %v118 = vld [vmem:[#allocation7 + $0x8] sm:$0x7]
    %v121 = vlaneseq
    %v122 = vshrl.u32 %v121, 7
    %v123 = vsub.s32 0, %v122
    %v124 = vrot.slane %v117, %v123
    %v125 = vlaneseq
    %v126 = vshrl.u32 %v125, 7
    %v127 = vsub.s32 4, %v126
    %v128 = vrot.slane %v117, %v127
    %v129 = vlaneseq
    %v130 = vshrl.u32 %v129, 7
    %v131 = vsub.s32 0, %v130
    %v132 = vrot.slane %v118, %v131
    %v136 = vlaneseq
    %v137 = vshrl.u32 %v136, 7
    %v138 = vsub.s32 0, %v137
    %v139 = vrot.slane %v124, %v138
    %v140 = vlaneseq
    %v141 = vshrl.u32 %v140, 7
    %v142 = vsub.s32 0, %v141
    %v143 = vrot.slane %v128, %v142
    %v144 = vlaneseq
    %v145 = vshrl.u32 %v144, 7
    %v146 = vsub.s32 0, %v145
    %v147 = vrot.slane %v132, %v146
    %v154 = vunpack.c.l.b16 %v103
    %v155 = vunpack.c.l.b16 %v104
    %v156 = vunpack.c.l.b16 %v105
    %v157 = vunpack.c.l.b16 %v106
    %v158 = vunpack.c.l.b16 %v107
    %v159 = vunpack.c.l.b16 %v108
    %v160 = vpack.c.b16 %v155, %v154
    %v161 = vpack.c.b16 %v157, %v156
    %v162 = vpack.c.b16 %v159, %v158
    %v171 = vunpack.c.l.b16 %v109
    %v172 = vunpack.c.h.b16 %v109
    %v173 = vunpack.c.l.b16 %v110
    %v174 = vunpack.c.l.b16 %v111
    %v175 = vunpack.c.h.b16 %v111
    %v176 = vunpack.c.l.b16 %v112
    %v177 = vunpack.c.l.b16 %v113
    %v178 = vunpack.c.h.b16 %v113
    %v179 = vunpack.c.l.b16 %v114
    %v180 = vunpack.c.l.b16 %v115
    %v181 = vunpack.c.h.b16 %v115
    %v182 = vunpack.c.l.b16 %v116
    %v183 = vpack.c.b16 %v174, %v171
    %v184 = vpack.c.b16 %v175, %v172
    %v185 = vpack.c.b16 %v176, %v173
    %v186 = vpack.c.b16 %v180, %v177
    %v187 = vpack.c.b16 %v181, %v178
    %v188 = vpack.c.b16 %v182, %v179
    %vm195 = vcmask 261120
    %v197 = vsel %vm195, %v160, 0
    %v200 = vsel %vm195, %v161, 0
    %v203 = vsel %vm195, %v162, 0
    %205 = vmatprep.subr.bf16.mxu0 %v184
    %206 = vmatpush1.bf16.msra.mxu0 %v183
    %207 = vmatprep.subr.bf16.mxu0 %v187
    %208 = vmatpush1.bf16.msra.mxu0 %v186
    %209 = vmatprep.subr.bf16.mxu0 0
    %210 = vmatpush1.bf16.msra.mxu0 0
    %211 = vmatprep.subr.bf16.mxu0 0
    %212 = vmatpush1.bf16.msra.mxu0 0
    %213 = vmatprep.subr.bf16.mxu0 0
    %214 = vmatpush1.bf16.msra.mxu0 0
    %215 = vmatprep.subr.bf16.mxu0 0
    %216 = vmatpush1.bf16.msra.mxu0 0
    %217 = vmatprep.subr.bf16.mxu0 0
    %218 = vmatpush1.bf16.msra.mxu0 0
    %219 = vmatprep.subr.bf16.mxu0 0
    %220 = vmatpush1.bf16.msra.mxu0 0
    %221 = vmatprep.subr.bf16.mxu0 0
    %222 = vmatpush1.bf16.msra.mxu0 0
    %223 = vmatprep.subr.bf16.mxu0 0
    %224 = vmatpush1.bf16.msra.mxu0 0
    %225 = vmatprep.subr.bf16.mxu0 0
    %226 = vmatpush1.bf16.msra.mxu0 0
    %227 = vmatprep.subr.bf16.mxu0 0
    %228 = vmatpush1.bf16.msra.mxu0 0
    %229 = vmatprep.subr.bf16.mxu0 0
    %230 = vmatpush1.bf16.msra.mxu0 0
    %231 = vmatprep.subr.bf16.mxu0 0
    %232 = vmatpush1.bf16.msra.mxu0 0
    %233 = vmatprep.subr.bf16.mxu0 0
    %234 = vmatpush1.bf16.msra.mxu0 0
    %235 = vmatprep.subr.bf16.mxu0 0
    %236 = vmatpush1.bf16.msra.mxu0 0
    %237 = vmatprep.mubr.bf16.mxu0 0
    %238 = vmatmul.mubr.bf16.gmra.mrb[0].mxu0 %v197
    %v239 = vpop.f32.mrb[0].mxu0
    %v240 = vadd.f32 %v139, %v239
    %v241 = vpop.f32.mrb[0].mxu0
    %v242 = vadd.f32 %v143, %v241
    %v243 = vpop.f32.mrb[0].mxu0
    %v244 = vadd.f32 %v139, %v243
    %v245 = vpop.f32.mrb[0].mxu0
    %v246 = vadd.f32 %v143, %v245
    %247 = vmatprep.mubr.bf16.mxu0 0
    %248 = vmatmul.mubr.bf16.gmra.mrb[0].mxu0 %v200
    %v249 = vpop.f32.mrb[0].mxu0
    %v250 = vadd.f32 %v139, %v249
    %v251 = vpop.f32.mrb[0].mxu0
    %v252 = vadd.f32 %v143, %v251
    %v253 = vpop.f32.mrb[0].mxu0
    %v254 = vadd.f32 %v139, %v253
    %v255 = vpop.f32.mrb[0].mxu0
    %v256 = vadd.f32 %v143, %v255
    %257 = vmatprep.mubr.bf16.mxu0 0
    %258 = vmatmul.mubr.bf16.gmra.mrb[0].mxu0 %v203
    %v259 = vpop.f32.mrb[0].mxu0
    %v260 = vadd.f32 %v139, %v259
    %v261 = vpop.f32.mrb[0].mxu0
    %v262 = vadd.f32 %v143, %v261
    %v263 = vpop.f32.mrb[0].mxu0
    %v264 = vadd.f32 %v139, %v263
    %v265 = vpop.f32.mrb[0].mxu0
    %v266 = vadd.f32 %v143, %v265
    %267 = vdwg.mxu0
    %268 = vmatprep.subr.bf16.mxu0 0
    %269 = vmatpush1.bf16.msra.mxu0 %v185
    %270 = vmatprep.subr.bf16.mxu0 0
    %271 = vmatpush1.bf16.msra.mxu0 %v188
    %272 = vmatprep.subr.bf16.mxu0 0
    %273 = vmatpush1.bf16.msra.mxu0 0
    %274 = vmatprep.subr.bf16.mxu0 0
    %275 = vmatpush1.bf16.msra.mxu0 0
    %276 = vmatprep.subr.bf16.mxu0 0
    %277 = vmatpush1.bf16.msra.mxu0 0
    %278 = vmatprep.subr.bf16.mxu0 0
    %279 = vmatpush1.bf16.msra.mxu0 0
    %280 = vmatprep.subr.bf16.mxu0 0
    %281 = vmatpush1.bf16.msra.mxu0 0
    %282 = vmatprep.subr.bf16.mxu0 0
    %283 = vmatpush1.bf16.msra.mxu0 0
    %284 = vmatprep.subr.bf16.mxu0 0
    %285 = vmatpush1.bf16.msra.mxu0 0
    %286 = vmatprep.subr.bf16.mxu0 0
    %287 = vmatpush1.bf16.msra.mxu0 0
    %288 = vmatprep.subr.bf16.mxu0 0
    %289 = vmatpush1.bf16.msra.mxu0 0
    %290 = vmatprep.subr.bf16.mxu0 0
    %291 = vmatpush1.bf16.msra.mxu0 0
    %292 = vmatprep.subr.bf16.mxu0 0
    %293 = vmatpush1.bf16.msra.mxu0 0
    %294 = vmatprep.subr.bf16.mxu0 0
    %295 = vmatpush1.bf16.msra.mxu0 0
    %296 = vmatprep.subr.bf16.mxu0 0
    %297 = vmatpush1.bf16.msra.mxu0 0
    %298 = vmatprep.subr.bf16.mxu0 0
    %299 = vmatpush1.bf16.msra.mxu0 0
    %300 = vmatprep.mubr.bf16.mxu0 0
    %301 = vmatmul.mubr.bf16.gmra.mrb[0].mxu0 %v197
    %v302 = vpop.f32.mrb[0].mxu0
    %v303 = vadd.f32 %v147, %v302
    %v304 = vpop.f32.mrb[0].mxu0
    %v305 = vpop.f32.mrb[0].mxu0
    %v306 = vadd.f32 %v147, %v305
    %v307 = vpop.f32.mrb[0].mxu0
    %308 = vmatprep.mubr.bf16.mxu0 0
    %309 = vmatmul.mubr.bf16.gmra.mrb[0].mxu0 %v200
    %v310 = vpop.f32.mrb[0].mxu0
    %v311 = vadd.f32 %v147, %v310
    %v312 = vpop.f32.mrb[0].mxu0
    %v313 = vpop.f32.mrb[0].mxu0
    %v314 = vadd.f32 %v147, %v313
    %v315 = vpop.f32.mrb[0].mxu0
    %316 = vmatprep.mubr.bf16.mxu0 0
    %317 = vmatmul.mubr.bf16.gmra.mrb[0].mxu0 %v203
    %v318 = vpop.f32.mrb[0].mxu0
    %v319 = vadd.f32 %v147, %v318
    %v320 = vpop.f32.mrb[0].mxu0
    %v321 = vpop.f32.mrb[0].mxu0
    %v322 = vadd.f32 %v147, %v321
    %v323 = vpop.f32.mrb[0].mxu0
    %324 = vdwg.mxu0
    %v325 = vmax.f32 %v240, 0.0
    %v326 = vmax.f32 %v242, 0.0
    %v327 = vmax.f32 %v303, 0.0
    %v328 = vmax.f32 %v244, 0.0
    %v329 = vmax.f32 %v246, 0.0
    %v330 = vmax.f32 %v306, 0.0
    %v331 = vmax.f32 %v250, 0.0
    %v332 = vmax.f32 %v252, 0.0
    %v333 = vmax.f32 %v311, 0.0
    %v334 = vmax.f32 %v254, 0.0
    %v335 = vmax.f32 %v256, 0.0
    %v336 = vmax.f32 %v314, 0.0
    %v337 = vmax.f32 %v260, 0.0
    %v338 = vmax.f32 %v262, 0.0
    %v339 = vmax.f32 %v319, 0.0
    %v340 = vmax.f32 %v264, 0.0
    %v341 = vmax.f32 %v266, 0.0
    %v342 = vmax.f32 %v322, 0.0
    %v361 = vcombine.low %v325, %v326
    %v362 = vcombine.high %v325, %v326
    %v363 = vcombine.high %v327, %v327
    %v364 = vcombine.low %v328, %v329
    %v365 = vcombine.high %v328, %v329
    %v366 = vcombine.high %v330, %v330
    %v367 = vcombine.low %v331, %v332
    %v368 = vcombine.high %v331, %v332
    %v369 = vcombine.high %v333, %v333
    %v370 = vcombine.low %v334, %v335
    %v371 = vcombine.high %v334, %v335
    %v372 = vcombine.high %v336, %v336
    %v373 = vcombine.low %v337, %v338
    %v374 = vcombine.high %v337, %v338
    %v375 = vcombine.high %v339, %v339
    %v376 = vcombine.low %v340, %v341
    %v377 = vcombine.high %v340, %v341
    %v378 = vcombine.high %v342, %v342
    %v397 = vmax.f32 %v361, %v365
    %v398 = vmax.f32 %v327, %v366
    %v399 = vmax.f32 %v362, %v367
    %v400 = vmax.f32 %v363, %v333
    %v401 = vmax.f32 %v364, %v368
    %v402 = vmax.f32 %v330, %v369
    %v403 = vmax.f32 %v370, %v374
    %v404 = vmax.f32 %v336, %v375
    %v405 = vmax.f32 %v371, %v376
    %v406 = vmax.f32 %v372, %v342
    %v407 = vmax.f32 %v373, %v377
    %v408 = vmax.f32 %v339, %v378
    %v409 = vmax.f32 %v397, %v403
    %v410 = vmax.f32 %v398, %v404
    %v411 = vmax.f32 %v399, %v405
    %v412 = vmax.f32 %v400, %v406
    %v413 = vmax.f32 %v401, %v407
    %v414 = vmax.f32 %v402, %v408
    %v415 = vlaneseq
    %v416 = vshrl.u32 %v415, 7
    %v417 = vsub.s32 1, %v416
    %v418 = vrot.slane %v117, %v417
    %v419 = vlaneseq
    %v420 = vshrl.u32 %v419, 7
    %v421 = vsub.s32 5, %v420
    %v422 = vrot.slane %v117, %v421
    %v423 = vlaneseq
    %v424 = vshrl.u32 %v423, 7
    %v425 = vsub.s32 1, %v424
    %v426 = vrot.slane %v118, %v425
    %v430 = vlaneseq
    %v431 = vshrl.u32 %v430, 7
    %v432 = vsub.s32 1, %v431
    %v433 = vrot.slane %v418, %v432
    %v434 = vlaneseq
    %v435 = vshrl.u32 %v434, 7
    %v436 = vsub.s32 1, %v435
    %v437 = vrot.slane %v422, %v436
    %v438 = vlaneseq
    %v439 = vshrl.u32 %v438, 7
    %v440 = vsub.s32 1, %v439
    %v441 = vrot.slane %v426, %v440
    %v445 = vcombine.low %v433, %v437
    %v446 = vcombine.high %v433, %v437
    %v447 = vcombine.high %v441, %v441
    %v451 = vmul.f32 %v409, %v445
    %v452 = vmul.f32 %v410, %v441
    %v453 = vmul.f32 %v411, %v446
    %v454 = vmul.f32 %v412, %v447
    %v455 = vmul.f32 %v413, %v445
    %v456 = vmul.f32 %v414, %v441
    %v457 = vlaneseq
    %v458 = vshrl.u32 %v457, 7
    %v459 = vsub.s32 2, %v458
    %v460 = vrot.slane %v117, %v459
    %v461 = vlaneseq
    %v462 = vshrl.u32 %v461, 7
    %v463 = vsub.s32 6, %v462
    %v464 = vrot.slane %v117, %v463
    %v465 = vlaneseq
    %v466 = vshrl.u32 %v465, 7
    %v467 = vsub.s32 2, %v466
    %v468 = vrot.slane %v118, %v467
    %v472 = vlaneseq
    %v473 = vshrl.u32 %v472, 7
    %v474 = vsub.s32 2, %v473
    %v475 = vrot.slane %v460, %v474
    %v476 = vlaneseq
    %v477 = vshrl.u32 %v476, 7
    %v478 = vsub.s32 2, %v477
    %v479 = vrot.slane %v464, %v478
    %v480 = vlaneseq
    %v481 = vshrl.u32 %v480, 7
    %v482 = vsub.s32 2, %v481
    %v483 = vrot.slane %v468, %v482
    %v487 = vcombine.low %v475, %v479
    %v488 = vcombine.high %v475, %v479
    %v489 = vcombine.high %v483, %v483
    %v493 = vadd.f32 %v451, %v487
    %v494 = vadd.f32 %v452, %v483
    %v495 = vadd.f32 %v453, %v488
    %v496 = vadd.f32 %v454, %v489
    %v497 = vadd.f32 %v455, %v487
    %v498 = vadd.f32 %v456, %v483
    %v504 = vcombine.low %v493, %v495
    %v505 = vcombine.high %v493, %v495
    %v506 = vcombine.low %v494, %v496
    %v507 = vcombine.high %v497, %v497
    %v512 = vpack.c.bf16 %v497, %v504
    %v513 = vpack.c.bf16 %v507, %v505
    %v514 = vpack.c.bf16 %v498, %v506
    %v518 = vcombine.low %v512, %v513
    %v519 = vcombine.high %v512, %v513
    %v520 = vcombine.high %v514, %v514
    %v522 = vunpack.c.l.s4 1966171168
    %v523 = vunpack.c.0.s8 %v522
    %v524 = vlaneseq
    %v525 = vshrl.u32 %v524, 7
    %v526 = vsub.s32 %v523, %v525
    %v527 = vrot.slane %v518, %v526
    %v529 = vunpack.c.l.s4 1966171168
    %v530 = vunpack.c.0.s8 %v529
    %v531 = vlaneseq
    %v532 = vshrl.u32 %v531, 7
    %v533 = vsub.s32 %v530, %v532
    %v534 = vrot.slane %v519, %v533
    %v536 = vunpack.c.l.s4 1966171168
    %v537 = vunpack.c.0.s8 %v536
    %v538 = vlaneseq
    %v539 = vshrl.u32 %v538, 7
    %v540 = vsub.s32 %v537, %v539
    %v541 = vrot.slane %v514, %v540
    %v543 = vunpack.c.l.s4 1966171168
    %v544 = vunpack.c.0.s8 %v543
    %v545 = vlaneseq
    %v546 = vshrl.u32 %v545, 7
    %v547 = vsub.s32 %v544, %v546
    %v548 = vrot.slane %v520, %v547
    %v549 = vcombine.low %v527, %v541
    %v550 = vcombine.high %v527, %v541
    %v551 = vcombine.low %v534, %v548
    %v552 = vcombine.high %v534, %v548
    %v554 = vunpack.c.l.s4 1966171168
    %v555 = vunpack.c.0.s8 %v554
    %v556 = vlaneseq
    %v557 = vshrl.u32 %v556, 7
    %v558 = vsub.s32 %v555, %v557
    %v559 = vrot.slane %v549, %v558
    %v561 = vunpack.c.l.s4 1966171168
    %v562 = vunpack.c.0.s8 %v561
    %v563 = vlaneseq
    %v564 = vshrl.u32 %v563, 7
    %v565 = vsub.s32 %v562, %v564
    %v566 = vrot.slane %v551, %v565
    %v568 = vunpack.c.l.s4 1966171168
    %v569 = vunpack.c.0.s8 %v568
    %v570 = vlaneseq
    %v571 = vshrl.u32 %v570, 7
    %v572 = vsub.s32 %v569, %v571
    %v573 = vrot.slane %v550, %v572
    %v575 = vunpack.c.l.s4 1966171168
    %v576 = vunpack.c.0.s8 %v575
    %v577 = vlaneseq
    %v578 = vshrl.u32 %v577, 7
    %v579 = vsub.s32 %v576, %v578
    %v580 = vrot.slane %v552, %v579
    %v581 = vcombine.high %v559, %v559
    %v582 = vcombine.high %v573, %v573
    %v583 = vld [vmem:[#allocation8] sm:$0xf]
    %v584 = vld [vmem:[#allocation8 + $0x4] sm:$0xf]
    %v585 = vld [vmem:[#allocation8 + $0x8] sm:$0xf]
    %v586 = vld [vmem:[#allocation8 + $0xc] sm:$0xf]
    %v587 = vld [vmem:[#allocation8 + $0x10] sm:$0xf]
    %v588 = vld [vmem:[#allocation8 + $0x14] sm:$0xf]
    %v589 = vld [vmem:[#allocation8 + $0x18] sm:$0xf]
    %v590 = vld [vmem:[#allocation8 + $0x1c] sm:$0xf]
    %v591 = vld [vmem:[#allocation8 + $0x20] sm:$0xf]
    %v592 = vld [vmem:[#allocation8 + $0x24] sm:$0xf]
    %v593 = vld [vmem:[#allocation8 + $0x28] sm:$0xf]
    %v594 = vld [vmem:[#allocation8 + $0x2c] sm:$0xf]
    %v595 = vld [vmem:[#allocation8 + $0x30] sm:$0xf]
    %v596 = vld [vmem:[#allocation8 + $0x34] sm:$0xf]
    %v597 = vld [vmem:[#allocation8 + $0x38] sm:$0xf]
    %v598 = vld [vmem:[#allocation8 + $0x3c] sm:$0xf]
    %v599 = vld [vmem:[#allocation8 + $0x40] sm:$0xf]
    %v600 = vld [vmem:[#allocation8 + $0x44] sm:$0xf]
    %v601 = vld [vmem:[#allocation8 + $0x48] sm:$0xf]
    %v602 = vld [vmem:[#allocation8 + $0x4c] sm:$0xf]
    %v603 = vld [vmem:[#allocation8 + $0x50] sm:$0xf]
    %v604 = vld [vmem:[#allocation8 + $0x54] sm:$0xf]
    %v605 = vld [vmem:[#allocation8 + $0x58] sm:$0xf]
    %v606 = vld [vmem:[#allocation8 + $0x5c] sm:$0xf]
    %v607 = vld [vmem:[#allocation8 + $0x60] sm:$0xf]
    %v608 = vld [vmem:[#allocation8 + $0x64] sm:$0xf]
    %v609 = vld [vmem:[#allocation8 + $0x68] sm:$0xf]
    %v610 = vld [vmem:[#allocation8 + $0x6c] sm:$0xf]
    %v611 = vld [vmem:[#allocation8 + $0x70] sm:$0xf]
    %v612 = vld [vmem:[#allocation8 + $0x74] sm:$0xf]
    %v613 = vld [vmem:[#allocation8 + $0x78] sm:$0xf]
    %v614 = vld [vmem:[#allocation8 + $0x7c] sm:$0xf]
    %v615 = vld [vmem:[#allocation8 + $0x80] sm:$0xf]
    %v616 = vld [vmem:[#allocation8 + $0x84] sm:$0xf]
    %v617 = vld [vmem:[#allocation8 + $0x88] sm:$0xf]
    %v618 = vld [vmem:[#allocation8 + $0x8c] sm:$0xf]
    %v619 = vld [vmem:[#allocation8 + $0x90] sm:$0xf]
    %v620 = vld [vmem:[#allocation8 + $0x94] sm:$0xf]
    %v621 = vld [vmem:[#allocation8 + $0x98] sm:$0xf]
    %v622 = vld [vmem:[#allocation8 + $0x9c] sm:$0xf]
    %s623 = scalar_lea.vmem [#allocation8], 160
    %v624 = vld [vmem:[%s623] sm:$0xf]
    %v625 = vld [vmem:[%s623 + $0x4] sm:$0xf]
    %v626 = vld [vmem:[%s623 + $0x8] sm:$0xf]
    %v627 = vld [vmem:[%s623 + $0xc] sm:$0xf]
    %v628 = vld [vmem:[%s623 + $0x10] sm:$0xf]
    %v629 = vld [vmem:[%s623 + $0x14] sm:$0xf]
    %v630 = vld [vmem:[%s623 + $0x18] sm:$0xf]
    %v631 = vld [vmem:[%s623 + $0x1c] sm:$0xf]
    %v632 = vld [vmem:[%s623 + $0x20] sm:$0xf]
    %v633 = vld [vmem:[%s623 + $0x24] sm:$0xf]
    %v634 = vld [vmem:[%s623 + $0x28] sm:$0xf]
    %v635 = vld [vmem:[%s623 + $0x2c] sm:$0xf]
    %v636 = vld [vmem:[%s623 + $0x30] sm:$0xf]
    %v637 = vld [vmem:[%s623 + $0x34] sm:$0xf]
    %v638 = vld [vmem:[%s623 + $0x38] sm:$0xf]
    %v639 = vld [vmem:[%s623 + $0x3c] sm:$0xf]
    %v640 = vld [vmem:[%s623 + $0x40] sm:$0xf]
    %v641 = vld [vmem:[%s623 + $0x44] sm:$0xf]
    %v642 = vld [vmem:[%s623 + $0x48] sm:$0xf]
    %v643 = vld [vmem:[%s623 + $0x4c] sm:$0xf]
    %v644 = vld [vmem:[%s623 + $0x50] sm:$0xf]
    %v645 = vld [vmem:[%s623 + $0x54] sm:$0xf]
    %v646 = vld [vmem:[%s623 + $0x58] sm:$0xf]
    %v647 = vld [vmem:[%s623 + $0x5c] sm:$0xf]
    %v648 = vld [vmem:[%s623 + $0x60] sm:$0xf]
    %v649 = vld [vmem:[%s623 + $0x64] sm:$0xf]
    %v650 = vld [vmem:[%s623 + $0x68] sm:$0xf]
    %v651 = vld [vmem:[%s623 + $0x6c] sm:$0xf]
    %v652 = vld [vmem:[%s623 + $0x70] sm:$0xf]
    %v653 = vld [vmem:[%s623 + $0x74] sm:$0xf]
    %v654 = vld [vmem:[%s623 + $0x78] sm:$0xf]
    %v655 = vld [vmem:[%s623 + $0x7c] sm:$0xf]
    %v656 = vld [vmem:[%s623 + $0x80] sm:$0xf]
    %v657 = vld [vmem:[%s623 + $0x84] sm:$0xf]
    %v658 = vld [vmem:[%s623 + $0x88] sm:$0xf]
    %v659 = vld [vmem:[%s623 + $0x8c] sm:$0xf]
    %v660 = vld [vmem:[%s623 + $0x90] sm:$0xf]
    %v661 = vld [vmem:[%s623 + $0x94] sm:$0xf]
    %v662 = vld [vmem:[%s623 + $0x98] sm:$0xf]
    %v663 = vld [vmem:[%s623 + $0x9c] sm:$0xf]
    %v665 = vunpack.c.l.s4 1966171168
    %v666 = vunpack.c.0.s8 %v665
    %v667 = vlaneseq
    %v668 = vshrl.u32 %v667, 7
    %v669 = vsub.s32 %v666, %v668
    %v670 = vrot.slane %v573, %v669
    %v671 = vcombine.high %v670, %v670
    %v673 = vunpack.c.l.s4 1966171168
    %v674 = vunpack.c.0.s8 %v673
    %v675 = vlaneseq
    %v676 = vshrl.u32 %v675, 7
    %v677 = vsub.s32 %v674, %v676
    %v678 = vrot.slane %v670, %v677
    %v680 = vunpack.c.l.s4 1966171168
    %v681 = vunpack.c.0.s8 %v680
    %v682 = vlaneseq
    %v683 = vshrl.u32 %v682, 7
    %v684 = vsub.s32 %v681, %v683
    %v685 = vrot.slane %v671, %v684
    %v686 = vcombine.high %v678, %v678
    %v729 = vunpack.c.l.b16 %v624
    %v730 = vunpack.c.l.b16 %v625
    %v731 = vunpack.c.l.b16 %v626
    %v732 = vunpack.c.l.b16 %v627
    %v733 = vunpack.c.l.b16 %v628
    %v734 = vunpack.c.l.b16 %v629
    %v735 = vunpack.c.l.b16 %v630
    %v736 = vunpack.c.l.b16 %v631
    %v737 = vunpack.c.l.b16 %v632
    %v738 = vunpack.c.l.b16 %v633
    %v739 = vunpack.c.l.b16 %v634
    %v740 = vunpack.c.l.b16 %v635
    %v741 = vunpack.c.l.b16 %v636
    %v742 = vunpack.c.l.b16 %v637
    %v743 = vunpack.c.l.b16 %v638
    %v744 = vunpack.c.l.b16 %v639
    %v745 = vunpack.c.l.b16 %v640
    %v746 = vunpack.c.l.b16 %v641
    %v747 = vunpack.c.l.b16 %v642
    %v748 = vunpack.c.l.b16 %v643
    %v749 = vunpack.c.l.b16 %v644
    %v750 = vunpack.c.l.b16 %v645
    %v751 = vunpack.c.l.b16 %v646
    %v752 = vunpack.c.l.b16 %v647
    %v753 = vunpack.c.l.b16 %v648
    %v754 = vunpack.c.l.b16 %v649
    %v755 = vunpack.c.l.b16 %v650
    %v756 = vunpack.c.l.b16 %v651
    %v757 = vunpack.c.l.b16 %v652
    %v758 = vunpack.c.l.b16 %v653
    %v759 = vunpack.c.l.b16 %v654
    %v760 = vunpack.c.l.b16 %v655
    %v761 = vunpack.c.l.b16 %v656
    %v762 = vunpack.c.l.b16 %v657
    %v763 = vunpack.c.l.b16 %v658
    %v764 = vunpack.c.l.b16 %v659
    %v765 = vunpack.c.l.b16 %v660
    %v766 = vunpack.c.l.b16 %v661
    %v767 = vunpack.c.l.b16 %v662
    %v768 = vunpack.c.l.b16 %v663
    %v769 = vpack.c.b16 %v730, %v729
    %v770 = vpack.c.b16 %v732, %v731
    %v771 = vpack.c.b16 %v734, %v733
    %v772 = vpack.c.b16 %v736, %v735
    %v773 = vpack.c.b16 %v738, %v737
    %v774 = vpack.c.b16 %v740, %v739
    %v775 = vpack.c.b16 %v742, %v741
    %v776 = vpack.c.b16 %v744, %v743
    %v777 = vpack.c.b16 %v746, %v745
    %v778 = vpack.c.b16 %v748, %v747
    %v779 = vpack.c.b16 %v750, %v749
    %v780 = vpack.c.b16 %v752, %v751
    %v781 = vpack.c.b16 %v754, %v753
    %v782 = vpack.c.b16 %v756, %v755
    %v783 = vpack.c.b16 %v758, %v757
    %v784 = vpack.c.b16 %v760, %v759
    %v785 = vpack.c.b16 %v762, %v761
    %v786 = vpack.c.b16 %v764, %v763
    %v787 = vpack.c.b16 %v766, %v765
    %v788 = vpack.c.b16 %v768, %v767
    %vm809 = vcmask 523264
    %v811 = vsel %vm809, %v686, 0
    %813 = vmatprep.subr.bf16.mxu0 0
    %814 = vmatpush1.bf16.msra.mxu0 %v769
    %815 = vmatprep.subr.bf16.mxu0 0
    %816 = vmatpush1.bf16.msra.mxu0 %v770
    %817 = vmatprep.subr.bf16.mxu0 0
    %818 = vmatpush1.bf16.msra.mxu0 %v771
    %819 = vmatprep.subr.bf16.mxu0 0
    %820 = vmatpush1.bf16.msra.mxu0 %v772
    %821 = vmatprep.subr.bf16.mxu0 0
    %822 = vmatpush1.bf16.msra.mxu0 %v773
    %823 = vmatprep.subr.bf16.mxu0 0
    %824 = vmatpush1.bf16.msra.mxu0 %v774
    %825 = vmatprep.subr.bf16.mxu0 0
    %826 = vmatpush1.bf16.msra.mxu0 %v775
    %827 = vmatprep.subr.bf16.mxu0 0
    %828 = vmatpush1.bf16.msra.mxu0 %v776
    %829 = vmatprep.subr.bf16.mxu0 0
    %830 = vmatpush1.bf16.msra.mxu0 %v777
    %831 = vmatprep.subr.bf16.mxu0 0
    %832 = vmatpush1.bf16.msra.mxu0 %v778
    %833 = vmatprep.subr.bf16.mxu0 0
    %834 = vmatpush1.bf16.msra.mxu0 %v779
    %835 = vmatprep.subr.bf16.mxu0 0
    %836 = vmatpush1.bf16.msra.mxu0 %v780
    %837 = vmatprep.subr.bf16.mxu0 0
    %838 = vmatpush1.bf16.msra.mxu0 %v781
    %839 = vmatprep.subr.bf16.mxu0 0
    %840 = vmatpush1.bf16.msra.mxu0 %v782
    %841 = vmatprep.subr.bf16.mxu0 0
    %842 = vmatpush1.bf16.msra.mxu0 %v783
    %843 = vmatprep.subr.bf16.mxu0 0
    %844 = vmatpush1.bf16.msra.mxu0 %v784
    %845 = vmatprep.mubr.bf16.mxu0 %v685
    %846 = vmatmul.mubr.bf16.gmra.mrb[0].mxu0 %v678
    %v847 = vpop.f32.mrb[0].mxu0
    %v848 = vadd.f32 0.0, %v847
    %v849 = vpop.f32.mrb[0].mxu0
    %v850 = vpop.f32.mrb[0].mxu0
    %v851 = vpop.f32.mrb[0].mxu0
    %852 = vdwg.mxu0
    %853 = vmatprep.subr.bf16.mxu0 0
    %854 = vmatpush1.bf16.msra.mxu0 %v785
    %855 = vmatprep.subr.bf16.mxu0 0
    %856 = vmatpush1.bf16.msra.mxu0 %v786
    %857 = vmatprep.subr.bf16.mxu0 0
    %858 = vmatpush1.bf16.msra.mxu0 %v787
    %859 = vmatprep.subr.bf16.mxu0 0
    %860 = vmatpush1.bf16.msra.mxu0 %v788
    %861 = vmatprep.subr.bf16.mxu0 0
    %862 = vmatpush1.bf16.msra.mxu0 0
    %863 = vmatprep.subr.bf16.mxu0 0
    %864 = vmatpush1.bf16.msra.mxu0 0
    %865 = vmatprep.subr.bf16.mxu0 0
    %866 = vmatpush1.bf16.msra.mxu0 0
    %867 = vmatprep.subr.bf16.mxu0 0
    %868 = vmatpush1.bf16.msra.mxu0 0
    %869 = vmatprep.subr.bf16.mxu0 0
    %870 = vmatpush1.bf16.msra.mxu0 0
    %871 = vmatprep.subr.bf16.mxu0 0
    %872 = vmatpush1.bf16.msra.mxu0 0
    %873 = vmatprep.subr.bf16.mxu0 0
    %874 = vmatpush1.bf16.msra.mxu0 0
    %875 = vmatprep.subr.bf16.mxu0 0
    %876 = vmatpush1.bf16.msra.mxu0 0
    %877 = vmatprep.subr.bf16.mxu0 0
    %878 = vmatpush1.bf16.msra.mxu0 0
    %879 = vmatprep.subr.bf16.mxu0 0
    %880 = vmatpush1.bf16.msra.mxu0 0
    %881 = vmatprep.subr.bf16.mxu0 0
    %882 = vmatpush1.bf16.msra.mxu0 0
    %883 = vmatprep.subr.bf16.mxu0 0
    %884 = vmatpush1.bf16.msra.mxu0 0
    %885 = vmatprep.mubr.bf16.mxu0 0
    %886 = vmatmul.mubr.bf16.gmra.mrb[0].mxu0 %v811
    %v887 = vpop.f32.mrb[0].mxu0
    %v888 = vadd.f32 %v848, %v887
    %v889 = vpop.f32.mrb[0].mxu0
    %v890 = vpop.f32.mrb[0].mxu0
    %v891 = vpop.f32.mrb[0].mxu0
    %892 = vdwg.mxu0
    %v894 = vunpack.c.l.s4 1966171168
    %v895 = vunpack.c.0.s8 %v894
    %v896 = vlaneseq
    %v897 = vshrl.u32 %v896, 7
    %v898 = vsub.s32 %v895, %v897
    %v899 = vrot.slane %v559, %v898
    %v900 = vcombine.high %v899, %v899
    %v902 = vunpack.c.l.s4 1966171168
    %v903 = vunpack.c.0.s8 %v902
    %v904 = vlaneseq
    %v905 = vshrl.u32 %v904, 7
    %v906 = vsub.s32 %v903, %v905
    %v907 = vrot.slane %v899, %v906
    %v909 = vunpack.c.l.s4 1966171168
    %v910 = vunpack.c.0.s8 %v909
    %v911 = vlaneseq
    %v912 = vshrl.u32 %v911, 7
    %v913 = vsub.s32 %v910, %v912
    %v914 = vrot.slane %v900, %v913
    %v915 = vcombine.high %v907, %v907
    %v958 = vunpack.c.l.b16 %v583
    %v959 = vunpack.c.l.b16 %v584
    %v960 = vunpack.c.l.b16 %v585
    %v961 = vunpack.c.l.b16 %v586
    %v962 = vunpack.c.l.b16 %v587
    %v963 = vunpack.c.l.b16 %v588
    %v964 = vunpack.c.l.b16 %v589
    %v965 = vunpack.c.l.b16 %v590
    %v966 = vunpack.c.l.b16 %v591
    %v967 = vunpack.c.l.b16 %v592
    %v968 = vunpack.c.l.b16 %v593
    %v969 = vunpack.c.l.b16 %v594
    %v970 = vunpack.c.l.b16 %v595
    %v971 = vunpack.c.l.b16 %v596
    %v972 = vunpack.c.l.b16 %v597
    %v973 = vunpack.c.l.b16 %v598
    %v974 = vunpack.c.l.b16 %v599
    %v975 = vunpack.c.l.b16 %v600
    %v976 = vunpack.c.l.b16 %v601
    %v977 = vunpack.c.l.b16 %v602
    %v978 = vunpack.c.l.b16 %v603
    %v979 = vunpack.c.l.b16 %v604
    %v980 = vunpack.c.l.b16 %v605
    %v981 = vunpack.c.l.b16 %v606
    %v982 = vunpack.c.l.b16 %v607
    %v983 = vunpack.c.l.b16 %v608
    %v984 = vunpack.c.l.b16 %v609
    %v985 = vunpack.c.l.b16 %v610
    %v986 = vunpack.c.l.b16 %v611
    %v987 = vunpack.c.l.b16 %v612
    %v988 = vunpack.c.l.b16 %v613
    %v989 = vunpack.c.l.b16 %v614
    %v990 = vunpack.c.l.b16 %v615
    %v991 = vunpack.c.l.b16 %v616
    %v992 = vunpack.c.l.b16 %v617
    %v993 = vunpack.c.l.b16 %v618
    %v994 = vunpack.c.l.b16 %v619
    %v995 = vunpack.c.l.b16 %v620
    %v996 = vunpack.c.l.b16 %v621
    %v997 = vunpack.c.l.b16 %v622
    %v998 = vpack.c.b16 %v959, %v958
    %v999 = vpack.c.b16 %v961, %v960
    %v1000 = vpack.c.b16 %v963, %v962
    %v1001 = vpack.c.b16 %v965, %v964
    %v1002 = vpack.c.b16 %v967, %v966
    %v1003 = vpack.c.b16 %v969, %v968
    %v1004 = vpack.c.b16 %v971, %v970
    %v1005 = vpack.c.b16 %v973, %v972
    %v1006 = vpack.c.b16 %v975, %v974
    %v1007 = vpack.c.b16 %v977, %v976
    %v1008 = vpack.c.b16 %v979, %v978
    %v1009 = vpack.c.b16 %v981, %v980
    %v1010 = vpack.c.b16 %v983, %v982
    %v1011 = vpack.c.b16 %v985, %v984
    %v1012 = vpack.c.b16 %v987, %v986
    %v1013 = vpack.c.b16 %v989, %v988
    %v1014 = vpack.c.b16 %v991, %v990
    %v1015 = vpack.c.b16 %v993, %v992
    %v1016 = vpack.c.b16 %v995, %v994
    %v1017 = vpack.c.b16 %v997, %v996
    %v1039 = vsel %vm809, %v915, 0
    %1041 = vmatprep.subr.bf16.mxu0 0
    %1042 = vmatpush1.bf16.msra.mxu0 %v998
    %1043 = vmatprep.subr.bf16.mxu0 0
    %1044 = vmatpush1.bf16.msra.mxu0 %v999
    %1045 = vmatprep.subr.bf16.mxu0 0
    %1046 = vmatpush1.bf16.msra.mxu0 %v1000
    %1047 = vmatprep.subr.bf16.mxu0 0
    %1048 = vmatpush1.bf16.msra.mxu0 %v1001
    %1049 = vmatprep.subr.bf16.mxu0 0
    %1050 = vmatpush1.bf16.msra.mxu0 %v1002
    %1051 = vmatprep.subr.bf16.mxu0 0
    %1052 = vmatpush1.bf16.msra.mxu0 %v1003
    %1053 = vmatprep.subr.bf16.mxu0 0
    %1054 = vmatpush1.bf16.msra.mxu0 %v1004
    %1055 = vmatprep.subr.bf16.mxu0 0
    %1056 = vmatpush1.bf16.msra.mxu0 %v1005
    %1057 = vmatprep.subr.bf16.mxu0 0
    %1058 = vmatpush1.bf16.msra.mxu0 %v1006
    %1059 = vmatprep.subr.bf16.mxu0 0
    %1060 = vmatpush1.bf16.msra.mxu0 %v1007
    %1061 = vmatprep.subr.bf16.mxu0 0
    %1062 = vmatpush1.bf16.msra.mxu0 %v1008
    %1063 = vmatprep.subr.bf16.mxu0 0
    %1064 = vmatpush1.bf16.msra.mxu0 %v1009
    %1065 = vmatprep.subr.bf16.mxu0 0
    %1066 = vmatpush1.bf16.msra.mxu0 %v1010
    %1067 = vmatprep.subr.bf16.mxu0 0
    %1068 = vmatpush1.bf16.msra.mxu0 %v1011
    %1069 = vmatprep.subr.bf16.mxu0 0
    %1070 = vmatpush1.bf16.msra.mxu0 %v1012
    %1071 = vmatprep.subr.bf16.mxu0 0
    %1072 = vmatpush1.bf16.msra.mxu0 %v1013
    %1073 = vmatprep.mubr.bf16.mxu0 %v914
    %1074 = vmatmul.mubr.bf16.gmra.mrb[0].mxu0 %v907
    %v1075 = vpop.f32.mrb[0].mxu0
    %v1076 = vadd.f32 %v888, %v1075
    %v1077 = vpop.f32.mrb[0].mxu0
    %v1078 = vpop.f32.mrb[0].mxu0
    %v1079 = vpop.f32.mrb[0].mxu0
    %1080 = vdwg.mxu0
    %1081 = vmatprep.subr.bf16.mxu0 0
    %1082 = vmatpush1.bf16.msra.mxu0 %v1014
    %1083 = vmatprep.subr.bf16.mxu0 0
    %1084 = vmatpush1.bf16.msra.mxu0 %v1015
    %1085 = vmatprep.subr.bf16.mxu0 0
    %1086 = vmatpush1.bf16.msra.mxu0 %v1016
    %1087 = vmatprep.subr.bf16.mxu0 0
    %1088 = vmatpush1.bf16.msra.mxu0 %v1017
    %1089 = vmatprep.subr.bf16.mxu0 0
    %1090 = vmatpush1.bf16.msra.mxu0 0
    %1091 = vmatprep.subr.bf16.mxu0 0
    %1092 = vmatpush1.bf16.msra.mxu0 0
    %1093 = vmatprep.subr.bf16.mxu0 0
    %1094 = vmatpush1.bf16.msra.mxu0 0
    %1095 = vmatprep.subr.bf16.mxu0 0
    %1096 = vmatpush1.bf16.msra.mxu0 0
    %1097 = vmatprep.subr.bf16.mxu0 0
    %1098 = vmatpush1.bf16.msra.mxu0 0
    %1099 = vmatprep.subr.bf16.mxu0 0
    %1100 = vmatpush1.bf16.msra.mxu0 0
    %1101 = vmatprep.subr.bf16.mxu0 0
    %1102 = vmatpush1.bf16.msra.mxu0 0
    %1103 = vmatprep.subr.bf16.mxu0 0
    %1104 = vmatpush1.bf16.msra.mxu0 0
    %1105 = vmatprep.subr.bf16.mxu0 0
    %1106 = vmatpush1.bf16.msra.mxu0 0
    %1107 = vmatprep.subr.bf16.mxu0 0
    %1108 = vmatpush1.bf16.msra.mxu0 0
    %1109 = vmatprep.subr.bf16.mxu0 0
    %1110 = vmatpush1.bf16.msra.mxu0 0
    %1111 = vmatprep.subr.bf16.mxu0 0
    %1112 = vmatpush1.bf16.msra.mxu0 0
    %1113 = vmatprep.mubr.bf16.mxu0 0
    %1114 = vmatmul.mubr.bf16.gmra.mrb[0].mxu0 %v1039
    %v1115 = vpop.f32.mrb[0].mxu0
    %v1116 = vadd.f32 %v1076, %v1115
    %v1117 = vpop.f32.mrb[0].mxu0
    %v1118 = vpop.f32.mrb[0].mxu0
    %v1119 = vpop.f32.mrb[0].mxu0
    %1120 = vdwg.mxu0
    %s1121 = scalar_lea.vmem [#allocation8], 320
    %v1122 = vld [vmem:[%s1121] sm:$0xf]
    %v1123 = vld [vmem:[%s1121 + $0x4] sm:$0xf]
    %v1124 = vld [vmem:[%s1121 + $0x8] sm:$0xf]
    %v1125 = vld [vmem:[%s1121 + $0xc] sm:$0xf]
    %v1126 = vld [vmem:[%s1121 + $0x10] sm:$0xf]
    %v1127 = vld [vmem:[%s1121 + $0x14] sm:$0xf]
    %v1128 = vld [vmem:[%s1121 + $0x18] sm:$0xf]
    %v1129 = vld [vmem:[%s1121 + $0x1c] sm:$0xf]
    %v1130 = vld [vmem:[%s1121 + $0x20] sm:$0xf]
    %v1131 = vld [vmem:[%s1121 + $0x24] sm:$0xf]
    %v1132 = vld [vmem:[%s1121 + $0x28] sm:$0xf]
    %v1133 = vld [vmem:[%s1121 + $0x2c] sm:$0xf]
    %v1134 = vld [vmem:[%s1121 + $0x30] sm:$0xf]
    %v1135 = vld [vmem:[%s1121 + $0x34] sm:$0xf]
    %v1136 = vld [vmem:[%s1121 + $0x38] sm:$0xf]
    %v1137 = vld [vmem:[%s1121 + $0x3c] sm:$0xf]
    %v1138 = vld [vmem:[%s1121 + $0x40] sm:$0xf]
    %v1139 = vld [vmem:[%s1121 + $0x44] sm:$0xf]
    %v1140 = vld [vmem:[%s1121 + $0x48] sm:$0xf]
    %v1141 = vld [vmem:[%s1121 + $0x4c] sm:$0xf]
    %v1142 = vld [vmem:[%s1121 + $0x50] sm:$0xf]
    %v1143 = vld [vmem:[%s1121 + $0x54] sm:$0xf]
    %v1144 = vld [vmem:[%s1121 + $0x58] sm:$0xf]
    %v1145 = vld [vmem:[%s1121 + $0x5c] sm:$0xf]
    %v1146 = vld [vmem:[%s1121 + $0x60] sm:$0xf]
    %v1147 = vld [vmem:[%s1121 + $0x64] sm:$0xf]
    %v1148 = vld [vmem:[%s1121 + $0x68] sm:$0xf]
    %v1149 = vld [vmem:[%s1121 + $0x6c] sm:$0xf]
    %v1150 = vld [vmem:[%s1121 + $0x70] sm:$0xf]
    %v1151 = vld [vmem:[%s1121 + $0x74] sm:$0xf]
    %v1152 = vld [vmem:[%s1121 + $0x78] sm:$0xf]
    %v1153 = vld [vmem:[%s1121 + $0x7c] sm:$0xf]
    %v1154 = vld [vmem:[%s1121 + $0x80] sm:$0xf]
    %v1155 = vld [vmem:[%s1121 + $0x84] sm:$0xf]
    %v1156 = vld [vmem:[%s1121 + $0x88] sm:$0xf]
    %v1157 = vld [vmem:[%s1121 + $0x8c] sm:$0xf]
    %v1158 = vld [vmem:[%s1121 + $0x90] sm:$0xf]
    %v1159 = vld [vmem:[%s1121 + $0x94] sm:$0xf]
    %v1160 = vld [vmem:[%s1121 + $0x98] sm:$0xf]
    %v1161 = vld [vmem:[%s1121 + $0x9c] sm:$0xf]
    %v1163 = vunpack.c.l.s4 1966171168
    %v1164 = vunpack.c.0.s8 %v1163
    %v1165 = vlaneseq
    %v1166 = vshrl.u32 %v1165, 7
    %v1167 = vsub.s32 %v1164, %v1166
    %v1168 = vrot.slane %v581, %v1167
    %v1169 = vcombine.high %v1168, %v1168
    %v1171 = vunpack.c.l.s4 1966171168
    %v1172 = vunpack.c.0.s8 %v1171
    %v1173 = vlaneseq
    %v1174 = vshrl.u32 %v1173, 7
    %v1175 = vsub.s32 %v1172, %v1174
    %v1176 = vrot.slane %v1168, %v1175
    %v1178 = vunpack.c.l.s4 1966171168
    %v1179 = vunpack.c.0.s8 %v1178
    %v1180 = vlaneseq
    %v1181 = vshrl.u32 %v1180, 7
    %v1182 = vsub.s32 %v1179, %v1181
    %v1183 = vrot.slane %v1169, %v1182
    %v1184 = vcombine.high %v1176, %v1176
    %v1227 = vunpack.c.l.b16 %v1122
    %v1228 = vunpack.c.l.b16 %v1123
    %v1229 = vunpack.c.l.b16 %v1124
    %v1230 = vunpack.c.l.b16 %v1125
    %v1231 = vunpack.c.l.b16 %v1126
    %v1232 = vunpack.c.l.b16 %v1127
    %v1233 = vunpack.c.l.b16 %v1128
    %v1234 = vunpack.c.l.b16 %v1129
    %v1235 = vunpack.c.l.b16 %v1130
    %v1236 = vunpack.c.l.b16 %v1131
    %v1237 = vunpack.c.l.b16 %v1132
    %v1238 = vunpack.c.l.b16 %v1133
    %v1239 = vunpack.c.l.b16 %v1134
    %v1240 = vunpack.c.l.b16 %v1135
    %v1241 = vunpack.c.l.b16 %v1136
    %v1242 = vunpack.c.l.b16 %v1137
    %v1243 = vunpack.c.l.b16 %v1138
    %v1244 = vunpack.c.l.b16 %v1139
    %v1245 = vunpack.c.l.b16 %v1140
    %v1246 = vunpack.c.l.b16 %v1141
    %v1247 = vunpack.c.l.b16 %v1142
    %v1248 = vunpack.c.l.b16 %v1143
    %v1249 = vunpack.c.l.b16 %v1144
    %v1250 = vunpack.c.l.b16 %v1145
    %v1251 = vunpack.c.l.b16 %v1146
    %v1252 = vunpack.c.l.b16 %v1147
    %v1253 = vunpack.c.l.b16 %v1148
    %v1254 = vunpack.c.l.b16 %v1149
    %v1255 = vunpack.c.l.b16 %v1150
    %v1256 = vunpack.c.l.b16 %v1151
    %v1257 = vunpack.c.l.b16 %v1152
    %v1258 = vunpack.c.l.b16 %v1153
    %v1259 = vunpack.c.l.b16 %v1154
    %v1260 = vunpack.c.l.b16 %v1155
    %v1261 = vunpack.c.l.b16 %v1156
    %v1262 = vunpack.c.l.b16 %v1157
    %v1263 = vunpack.c.l.b16 %v1158
    %v1264 = vunpack.c.l.b16 %v1159
    %v1265 = vunpack.c.l.b16 %v1160
    %v1266 = vunpack.c.l.b16 %v1161
    %v1267 = vpack.c.b16 %v1228, %v1227
    %v1268 = vpack.c.b16 %v1230, %v1229
    %v1269 = vpack.c.b16 %v1232, %v1231
    %v1270 = vpack.c.b16 %v1234, %v1233
    %v1271 = vpack.c.b16 %v1236, %v1235
    %v1272 = vpack.c.b16 %v1238, %v1237
    %v1273 = vpack.c.b16 %v1240, %v1239
    %v1274 = vpack.c.b16 %v1242, %v1241
    %v1275 = vpack.c.b16 %v1244, %v1243
    %v1276 = vpack.c.b16 %v1246, %v1245
    %v1277 = vpack.c.b16 %v1248, %v1247
    %v1278 = vpack.c.b16 %v1250, %v1249
    %v1279 = vpack.c.b16 %v1252, %v1251
    %v1280 = vpack.c.b16 %v1254, %v1253
    %v1281 = vpack.c.b16 %v1256, %v1255
    %v1282 = vpack.c.b16 %v1258, %v1257
    %v1283 = vpack.c.b16 %v1260, %v1259
    %v1284 = vpack.c.b16 %v1262, %v1261
    %v1285 = vpack.c.b16 %v1264, %v1263
    %v1286 = vpack.c.b16 %v1266, %v1265
    %v1308 = vsel %vm809, %v1184, 0
    %1310 = vmatprep.subr.bf16.mxu0 0
    %1311 = vmatpush1.bf16.msra.mxu0 %v1267
    %1312 = vmatprep.subr.bf16.mxu0 0
    %1313 = vmatpush1.bf16.msra.mxu0 %v1268
    %1314 = vmatprep.subr.bf16.mxu0 0
    %1315 = vmatpush1.bf16.msra.mxu0 %v1269
    %1316 = vmatprep.subr.bf16.mxu0 0
    %1317 = vmatpush1.bf16.msra.mxu0 %v1270
    %1318 = vmatprep.subr.bf16.mxu0 0
    %1319 = vmatpush1.bf16.msra.mxu0 %v1271
    %1320 = vmatprep.subr.bf16.mxu0 0
    %1321 = vmatpush1.bf16.msra.mxu0 %v1272
    %1322 = vmatprep.subr.bf16.mxu0 0
    %1323 = vmatpush1.bf16.msra.mxu0 %v1273
    %1324 = vmatprep.subr.bf16.mxu0 0
    %1325 = vmatpush1.bf16.msra.mxu0 %v1274
    %1326 = vmatprep.subr.bf16.mxu0 0
    %1327 = vmatpush1.bf16.msra.mxu0 %v1275
    %1328 = vmatprep.subr.bf16.mxu0 0
    %1329 = vmatpush1.bf16.msra.mxu0 %v1276
    %1330 = vmatprep.subr.bf16.mxu0 0
    %1331 = vmatpush1.bf16.msra.mxu0 %v1277
    %1332 = vmatprep.subr.bf16.mxu0 0
    %1333 = vmatpush1.bf16.msra.mxu0 %v1278
    %1334 = vmatprep.subr.bf16.mxu0 0
    %1335 = vmatpush1.bf16.msra.mxu0 %v1279
    %1336 = vmatprep.subr.bf16.mxu0 0
    %1337 = vmatpush1.bf16.msra.mxu0 %v1280
    %1338 = vmatprep.subr.bf16.mxu0 0
    %1339 = vmatpush1.bf16.msra.mxu0 %v1281
    %1340 = vmatprep.subr.bf16.mxu0 0
    %1341 = vmatpush1.bf16.msra.mxu0 %v1282
    %1342 = vmatprep.mubr.bf16.mxu0 %v1183
    %1343 = vmatmul.mubr.bf16.gmra.mrb[0].mxu0 %v1176
    %v1344 = vpop.f32.mrb[0].mxu0
    %v1345 = vadd.f32 0.0, %v1344
    %v1346 = vpop.f32.mrb[0].mxu0
    %v1347 = vpop.f32.mrb[0].mxu0
    %v1348 = vpop.f32.mrb[0].mxu0
    %1349 = vdwg.mxu0
    %1350 = vmatprep.subr.bf16.mxu0 0
    %1351 = vmatpush1.bf16.msra.mxu0 %v1283
    %1352 = vmatprep.subr.bf16.mxu0 0
    %1353 = vmatpush1.bf16.msra.mxu0 %v1284
    %1354 = vmatprep.subr.bf16.mxu0 0
    %1355 = vmatpush1.bf16.msra.mxu0 %v1285
    %1356 = vmatprep.subr.bf16.mxu0 0
    %1357 = vmatpush1.bf16.msra.mxu0 %v1286
    %1358 = vmatprep.subr.bf16.mxu0 0
    %1359 = vmatpush1.bf16.msra.mxu0 0
    %1360 = vmatprep.subr.bf16.mxu0 0
    %1361 = vmatpush1.bf16.msra.mxu0 0
    %1362 = vmatprep.subr.bf16.mxu0 0
    %1363 = vmatpush1.bf16.msra.mxu0 0
    %1364 = vmatprep.subr.bf16.mxu0 0
    %1365 = vmatpush1.bf16.msra.mxu0 0
    %1366 = vmatprep.subr.bf16.mxu0 0
    %1367 = vmatpush1.bf16.msra.mxu0 0
    %1368 = vmatprep.subr.bf16.mxu0 0
    %1369 = vmatpush1.bf16.msra.mxu0 0
    %1370 = vmatprep.subr.bf16.mxu0 0
    %1371 = vmatpush1.bf16.msra.mxu0 0
    %1372 = vmatprep.subr.bf16.mxu0 0
    %1373 = vmatpush1.bf16.msra.mxu0 0
    %1374 = vmatprep.subr.bf16.mxu0 0
    %1375 = vmatpush1.bf16.msra.mxu0 0
    %1376 = vmatprep.subr.bf16.mxu0 0
    %1377 = vmatpush1.bf16.msra.mxu0 0
    %1378 = vmatprep.subr.bf16.mxu0 0
    %1379 = vmatpush1.bf16.msra.mxu0 0
    %1380 = vmatprep.subr.bf16.mxu0 0
    %1381 = vmatpush1.bf16.msra.mxu0 0
    %1382 = vmatprep.mubr.bf16.mxu0 0
    %1383 = vmatmul.mubr.bf16.gmra.mrb[0].mxu0 %v1308
    %v1384 = vpop.f32.mrb[0].mxu0
    %v1385 = vadd.f32 %v1345, %v1384
    %v1386 = vpop.f32.mrb[0].mxu0
    %v1387 = vpop.f32.mrb[0].mxu0
    %v1388 = vpop.f32.mrb[0].mxu0
    %1389 = vdwg.mxu0
    %v1390 = vadd.f32 %v1116, %v1385
    %s1391 = scalar_lea.vmem [#allocation8], 480
    %v1392 = vld [vmem:[%s1391] sm:$0xf]
    %v1393 = vld [vmem:[%s1391 + $0x4] sm:$0xf]
    %v1394 = vld [vmem:[%s1391 + $0x8] sm:$0xf]
    %v1395 = vld [vmem:[%s1391 + $0xc] sm:$0xf]
    %v1396 = vld [vmem:[%s1391 + $0x10] sm:$0xf]
    %v1397 = vld [vmem:[%s1391 + $0x14] sm:$0xf]
    %v1398 = vld [vmem:[%s1391 + $0x18] sm:$0xf]
    %v1399 = vld [vmem:[%s1391 + $0x1c] sm:$0xf]
    %v1400 = vld [vmem:[%s1391 + $0x20] sm:$0xf]
    %v1401 = vld [vmem:[%s1391 + $0x24] sm:$0xf]
    %v1402 = vld [vmem:[%s1391 + $0x28] sm:$0xf]
    %v1403 = vld [vmem:[%s1391 + $0x2c] sm:$0xf]
    %v1404 = vld [vmem:[%s1391 + $0x30] sm:$0xf]
    %v1405 = vld [vmem:[%s1391 + $0x34] sm:$0xf]
    %v1406 = vld [vmem:[%s1391 + $0x38] sm:$0xf]
    %v1407 = vld [vmem:[%s1391 + $0x3c] sm:$0xf]
    %v1408 = vld [vmem:[%s1391 + $0x40] sm:$0xf]
    %v1409 = vld [vmem:[%s1391 + $0x44] sm:$0xf]
    %v1410 = vld [vmem:[%s1391 + $0x48] sm:$0xf]
    %v1411 = vld [vmem:[%s1391 + $0x4c] sm:$0xf]
    %v1412 = vld [vmem:[%s1391 + $0x50] sm:$0xf]
    %v1413 = vld [vmem:[%s1391 + $0x54] sm:$0xf]
    %v1414 = vld [vmem:[%s1391 + $0x58] sm:$0xf]
    %v1415 = vld [vmem:[%s1391 + $0x5c] sm:$0xf]
    %v1416 = vld [vmem:[%s1391 + $0x60] sm:$0xf]
    %v1417 = vld [vmem:[%s1391 + $0x64] sm:$0xf]
    %v1418 = vld [vmem:[%s1391 + $0x68] sm:$0xf]
    %v1419 = vld [vmem:[%s1391 + $0x6c] sm:$0xf]
    %v1420 = vld [vmem:[%s1391 + $0x70] sm:$0xf]
    %v1421 = vld [vmem:[%s1391 + $0x74] sm:$0xf]
    %v1422 = vld [vmem:[%s1391 + $0x78] sm:$0xf]
    %v1423 = vld [vmem:[%s1391 + $0x7c] sm:$0xf]
    %v1424 = vld [vmem:[%s1391 + $0x80] sm:$0xf]
    %v1425 = vld [vmem:[%s1391 + $0x84] sm:$0xf]
    %v1426 = vld [vmem:[%s1391 + $0x88] sm:$0xf]
    %v1427 = vld [vmem:[%s1391 + $0x8c] sm:$0xf]
    %v1428 = vld [vmem:[%s1391 + $0x90] sm:$0xf]
    %v1429 = vld [vmem:[%s1391 + $0x94] sm:$0xf]
    %v1430 = vld [vmem:[%s1391 + $0x98] sm:$0xf]
    %v1431 = vld [vmem:[%s1391 + $0x9c] sm:$0xf]
    %v1433 = vunpack.c.l.s4 1966171168
    %v1434 = vunpack.c.0.s8 %v1433
    %v1435 = vlaneseq
    %v1436 = vshrl.u32 %v1435, 7
    %v1437 = vsub.s32 %v1434, %v1436
    %v1438 = vrot.slane %v582, %v1437
    %v1439 = vcombine.high %v1438, %v1438
    %v1441 = vunpack.c.l.s4 1966171168
    %v1442 = vunpack.c.0.s8 %v1441
    %v1443 = vlaneseq
    %v1444 = vshrl.u32 %v1443, 7
    %v1445 = vsub.s32 %v1442, %v1444
    %v1446 = vrot.slane %v1438, %v1445
    %v1448 = vunpack.c.l.s4 1966171168
    %v1449 = vunpack.c.0.s8 %v1448
    %v1450 = vlaneseq
    %v1451 = vshrl.u32 %v1450, 7
    %v1452 = vsub.s32 %v1449, %v1451
    %v1453 = vrot.slane %v1439, %v1452
    %v1454 = vcombine.high %v1446, %v1446
    %v1497 = vunpack.c.l.b16 %v1392
    %v1498 = vunpack.c.l.b16 %v1393
    %v1499 = vunpack.c.l.b16 %v1394
    %v1500 = vunpack.c.l.b16 %v1395
    %v1501 = vunpack.c.l.b16 %v1396
    %v1502 = vunpack.c.l.b16 %v1397
    %v1503 = vunpack.c.l.b16 %v1398
    %v1504 = vunpack.c.l.b16 %v1399
    %v1505 = vunpack.c.l.b16 %v1400
    %v1506 = vunpack.c.l.b16 %v1401
    %v1507 = vunpack.c.l.b16 %v1402
    %v1508 = vunpack.c.l.b16 %v1403
    %v1509 = vunpack.c.l.b16 %v1404
    %v1510 = vunpack.c.l.b16 %v1405
    %v1511 = vunpack.c.l.b16 %v1406
    %v1512 = vunpack.c.l.b16 %v1407
    %v1513 = vunpack.c.l.b16 %v1408
    %v1514 = vunpack.c.l.b16 %v1409
    %v1515 = vunpack.c.l.b16 %v1410
    %v1516 = vunpack.c.l.b16 %v1411
    %v1517 = vunpack.c.l.b16 %v1412
    %v1518 = vunpack.c.l.b16 %v1413
    %v1519 = vunpack.c.l.b16 %v1414
    %v1520 = vunpack.c.l.b16 %v1415
    %v1521 = vunpack.c.l.b16 %v1416
    %v1522 = vunpack.c.l.b16 %v1417
    %v1523 = vunpack.c.l.b16 %v1418
    %v1524 = vunpack.c.l.b16 %v1419
    %v1525 = vunpack.c.l.b16 %v1420
    %v1526 = vunpack.c.l.b16 %v1421
    %v1527 = vunpack.c.l.b16 %v1422
    %v1528 = vunpack.c.l.b16 %v1423
    %v1529 = vunpack.c.l.b16 %v1424
    %v1530 = vunpack.c.l.b16 %v1425
    %v1531 = vunpack.c.l.b16 %v1426
    %v1532 = vunpack.c.l.b16 %v1427
    %v1533 = vunpack.c.l.b16 %v1428
    %v1534 = vunpack.c.l.b16 %v1429
    %v1535 = vunpack.c.l.b16 %v1430
    %v1536 = vunpack.c.l.b16 %v1431
    %v1537 = vpack.c.b16 %v1498, %v1497
    %v1538 = vpack.c.b16 %v1500, %v1499
    %v1539 = vpack.c.b16 %v1502, %v1501
    %v1540 = vpack.c.b16 %v1504, %v1503
    %v1541 = vpack.c.b16 %v1506, %v1505
    %v1542 = vpack.c.b16 %v1508, %v1507
    %v1543 = vpack.c.b16 %v1510, %v1509
    %v1544 = vpack.c.b16 %v1512, %v1511
    %v1545 = vpack.c.b16 %v1514, %v1513
    %v1546 = vpack.c.b16 %v1516, %v1515
    %v1547 = vpack.c.b16 %v1518, %v1517
    %v1548 = vpack.c.b16 %v1520, %v1519
    %v1549 = vpack.c.b16 %v1522, %v1521
    %v1550 = vpack.c.b16 %v1524, %v1523
    %v1551 = vpack.c.b16 %v1526, %v1525
    %v1552 = vpack.c.b16 %v1528, %v1527
    %v1553 = vpack.c.b16 %v1530, %v1529
    %v1554 = vpack.c.b16 %v1532, %v1531
    %v1555 = vpack.c.b16 %v1534, %v1533
    %v1556 = vpack.c.b16 %v1536, %v1535
    %v1578 = vsel %vm809, %v1454, 0
    %1580 = vmatprep.subr.bf16.mxu0 0
    %1581 = vmatpush1.bf16.msra.mxu0 %v1537
    %1582 = vmatprep.subr.bf16.mxu0 0
    %1583 = vmatpush1.bf16.msra.mxu0 %v1538
    %1584 = vmatprep.subr.bf16.mxu0 0
    %1585 = vmatpush1.bf16.msra.mxu0 %v1539
    %1586 = vmatprep.subr.bf16.mxu0 0
    %1587 = vmatpush1.bf16.msra.mxu0 %v1540
    %1588 = vmatprep.subr.bf16.mxu0 0
    %1589 = vmatpush1.bf16.msra.mxu0 %v1541
    %1590 = vmatprep.subr.bf16.mxu0 0
    %1591 = vmatpush1.bf16.msra.mxu0 %v1542
    %1592 = vmatprep.subr.bf16.mxu0 0
    %1593 = vmatpush1.bf16.msra.mxu0 %v1543
    %1594 = vmatprep.subr.bf16.mxu0 0
    %1595 = vmatpush1.bf16.msra.mxu0 %v1544
    %1596 = vmatprep.subr.bf16.mxu0 0
    %1597 = vmatpush1.bf16.msra.mxu0 %v1545
    %1598 = vmatprep.subr.bf16.mxu0 0
    %1599 = vmatpush1.bf16.msra.mxu0 %v1546
    %1600 = vmatprep.subr.bf16.mxu0 0
    %1601 = vmatpush1.bf16.msra.mxu0 %v1547
    %1602 = vmatprep.subr.bf16.mxu0 0
    %1603 = vmatpush1.bf16.msra.mxu0 %v1548
    %1604 = vmatprep.subr.bf16.mxu0 0
    %1605 = vmatpush1.bf16.msra.mxu0 %v1549
    %1606 = vmatprep.subr.bf16.mxu0 0
    %1607 = vmatpush1.bf16.msra.mxu0 %v1550
    %1608 = vmatprep.subr.bf16.mxu0 0
    %1609 = vmatpush1.bf16.msra.mxu0 %v1551
    %1610 = vmatprep.subr.bf16.mxu0 0
    %1611 = vmatpush1.bf16.msra.mxu0 %v1552
    %1612 = vmatprep.mubr.bf16.mxu0 %v1453
    %1613 = vmatmul.mubr.bf16.gmra.mrb[0].mxu0 %v1446
    %v1614 = vpop.f32.mrb[0].mxu0
    %v1615 = vadd.f32 0.0, %v1614
    %v1616 = vpop.f32.mrb[0].mxu0
    %v1617 = vpop.f32.mrb[0].mxu0
    %v1618 = vpop.f32.mrb[0].mxu0
    %1619 = vdwg.mxu0
    %1620 = vmatprep.subr.bf16.mxu0 0
    %1621 = vmatpush1.bf16.msra.mxu0 %v1553
    %1622 = vmatprep.subr.bf16.mxu0 0
    %1623 = vmatpush1.bf16.msra.mxu0 %v1554
    %1624 = vmatprep.subr.bf16.mxu0 0
    %1625 = vmatpush1.bf16.msra.mxu0 %v1555
    %1626 = vmatprep.subr.bf16.mxu0 0
    %1627 = vmatpush1.bf16.msra.mxu0 %v1556
    %1628 = vmatprep.subr.bf16.mxu0 0
    %1629 = vmatpush1.bf16.msra.mxu0 0
    %1630 = vmatprep.subr.bf16.mxu0 0
    %1631 = vmatpush1.bf16.msra.mxu0 0
    %1632 = vmatprep.subr.bf16.mxu0 0
    %1633 = vmatpush1.bf16.msra.mxu0 0
    %1634 = vmatprep.subr.bf16.mxu0 0
    %1635 = vmatpush1.bf16.msra.mxu0 0
    %1636 = vmatprep.subr.bf16.mxu0 0
    %1637 = vmatpush1.bf16.msra.mxu0 0
    %1638 = vmatprep.subr.bf16.mxu0 0
    %1639 = vmatpush1.bf16.msra.mxu0 0
    %1640 = vmatprep.subr.bf16.mxu0 0
    %1641 = vmatpush1.bf16.msra.mxu0 0
    %1642 = vmatprep.subr.bf16.mxu0 0
    %1643 = vmatpush1.bf16.msra.mxu0 0
    %1644 = vmatprep.subr.bf16.mxu0 0
    %1645 = vmatpush1.bf16.msra.mxu0 0
    %1646 = vmatprep.subr.bf16.mxu0 0
    %1647 = vmatpush1.bf16.msra.mxu0 0
    %1648 = vmatprep.subr.bf16.mxu0 0
    %1649 = vmatpush1.bf16.msra.mxu0 0
    %1650 = vmatprep.subr.bf16.mxu0 0
    %1651 = vmatpush1.bf16.msra.mxu0 0
    %1652 = vmatprep.mubr.bf16.mxu0 0
    %1653 = vmatmul.mubr.bf16.gmra.mrb[0].mxu0 %v1578
    %v1654 = vpop.f32.mrb[0].mxu0
    %v1655 = vadd.f32 %v1615, %v1654
    %v1656 = vpop.f32.mrb[0].mxu0
    %v1657 = vpop.f32.mrb[0].mxu0
    %v1658 = vpop.f32.mrb[0].mxu0
    %1659 = vdwg.mxu0
    %v1660 = vadd.f32 %v1390, %v1655
    %s1661 = scalar_lea.vmem [#allocation8], 640
    %v1662 = vld [vmem:[%s1661] sm:$0xf]
    %v1663 = vld [vmem:[%s1661 + $0x4] sm:$0xf]
    %v1664 = vld [vmem:[%s1661 + $0x8] sm:$0xf]
    %v1665 = vld [vmem:[%s1661 + $0xc] sm:$0xf]
    %v1666 = vld [vmem:[%s1661 + $0x10] sm:$0xf]
    %v1667 = vld [vmem:[%s1661 + $0x14] sm:$0xf]
    %v1668 = vld [vmem:[%s1661 + $0x18] sm:$0xf]
    %v1669 = vld [vmem:[%s1661 + $0x1c] sm:$0xf]
    %v1670 = vld [vmem:[%s1661 + $0x20] sm:$0xf]
    %v1671 = vld [vmem:[%s1661 + $0x24] sm:$0xf]
    %v1672 = vld [vmem:[%s1661 + $0x28] sm:$0xf]
    %v1673 = vld [vmem:[%s1661 + $0x2c] sm:$0xf]
    %v1674 = vld [vmem:[%s1661 + $0x30] sm:$0xf]
    %v1675 = vld [vmem:[%s1661 + $0x34] sm:$0xf]
    %v1676 = vld [vmem:[%s1661 + $0x38] sm:$0xf]
    %v1677 = vld [vmem:[%s1661 + $0x3c] sm:$0xf]
    %v1678 = vld [vmem:[%s1661 + $0x40] sm:$0xf]
    %v1679 = vld [vmem:[%s1661 + $0x44] sm:$0xf]
    %v1680 = vld [vmem:[%s1661 + $0x48] sm:$0xf]
    %v1681 = vld [vmem:[%s1661 + $0x4c] sm:$0xf]
    %v1682 = vld [vmem:[%s1661 + $0x50] sm:$0xf]
    %v1683 = vld [vmem:[%s1661 + $0x54] sm:$0xf]
    %v1684 = vld [vmem:[%s1661 + $0x58] sm:$0xf]
    %v1685 = vld [vmem:[%s1661 + $0x5c] sm:$0xf]
    %v1686 = vld [vmem:[%s1661 + $0x60] sm:$0xf]
    %v1687 = vld [vmem:[%s1661 + $0x64] sm:$0xf]
    %v1688 = vld [vmem:[%s1661 + $0x68] sm:$0xf]
    %v1689 = vld [vmem:[%s1661 + $0x6c] sm:$0xf]
    %v1690 = vld [vmem:[%s1661 + $0x70] sm:$0xf]
    %v1691 = vld [vmem:[%s1661 + $0x74] sm:$0xf]
    %v1692 = vld [vmem:[%s1661 + $0x78] sm:$0xf]
    %v1693 = vld [vmem:[%s1661 + $0x7c] sm:$0xf]
    %v1694 = vld [vmem:[%s1661 + $0x80] sm:$0xf]
    %v1695 = vld [vmem:[%s1661 + $0x84] sm:$0xf]
    %v1696 = vld [vmem:[%s1661 + $0x88] sm:$0xf]
    %v1697 = vld [vmem:[%s1661 + $0x8c] sm:$0xf]
    %v1698 = vld [vmem:[%s1661 + $0x90] sm:$0xf]
    %v1699 = vld [vmem:[%s1661 + $0x94] sm:$0xf]
    %v1700 = vld [vmem:[%s1661 + $0x98] sm:$0xf]
    %v1701 = vld [vmem:[%s1661 + $0x9c] sm:$0xf]
    %v1703 = vunpack.c.l.s4 1966171168
    %v1704 = vunpack.c.0.s8 %v1703
    %v1705 = vlaneseq
    %v1706 = vshrl.u32 %v1705, 7
    %v1707 = vsub.s32 %v1704, %v1706
    %v1708 = vrot.slane %v566, %v1707
    %v1709 = vcombine.high %v1708, %v1708
    %v1711 = vunpack.c.l.s4 1966171168
    %v1712 = vunpack.c.0.s8 %v1711
    %v1713 = vlaneseq
    %v1714 = vshrl.u32 %v1713, 7
    %v1715 = vsub.s32 %v1712, %v1714
    %v1716 = vrot.slane %v1708, %v1715
    %v1718 = vunpack.c.l.s4 1966171168
    %v1719 = vunpack.c.0.s8 %v1718
    %v1720 = vlaneseq
    %v1721 = vshrl.u32 %v1720, 7
    %v1722 = vsub.s32 %v1719, %v1721
    %v1723 = vrot.slane %v1709, %v1722
    %v1724 = vcombine.high %v1716, %v1716
    %v1767 = vunpack.c.l.b16 %v1662
    %v1768 = vunpack.c.l.b16 %v1663
    %v1769 = vunpack.c.l.b16 %v1664
    %v1770 = vunpack.c.l.b16 %v1665
    %v1771 = vunpack.c.l.b16 %v1666
    %v1772 = vunpack.c.l.b16 %v1667
    %v1773 = vunpack.c.l.b16 %v1668
    %v1774 = vunpack.c.l.b16 %v1669
    %v1775 = vunpack.c.l.b16 %v1670
    %v1776 = vunpack.c.l.b16 %v1671
    %v1777 = vunpack.c.l.b16 %v1672
    %v1778 = vunpack.c.l.b16 %v1673
    %v1779 = vunpack.c.l.b16 %v1674
    %v1780 = vunpack.c.l.b16 %v1675
    %v1781 = vunpack.c.l.b16 %v1676
    %v1782 = vunpack.c.l.b16 %v1677
    %v1783 = vunpack.c.l.b16 %v1678
    %v1784 = vunpack.c.l.b16 %v1679
    %v1785 = vunpack.c.l.b16 %v1680
    %v1786 = vunpack.c.l.b16 %v1681
    %v1787 = vunpack.c.l.b16 %v1682
    %v1788 = vunpack.c.l.b16 %v1683
    %v1789 = vunpack.c.l.b16 %v1684
    %v1790 = vunpack.c.l.b16 %v1685
    %v1791 = vunpack.c.l.b16 %v1686
    %v1792 = vunpack.c.l.b16 %v1687
    %v1793 = vunpack.c.l.b16 %v1688
    %v1794 = vunpack.c.l.b16 %v1689
    %v1795 = vunpack.c.l.b16 %v1690
    %v1796 = vunpack.c.l.b16 %v1691
    %v1797 = vunpack.c.l.b16 %v1692
    %v1798 = vunpack.c.l.b16 %v1693
    %v1799 = vunpack.c.l.b16 %v1694
    %v1800 = vunpack.c.l.b16 %v1695
    %v1801 = vunpack.c.l.b16 %v1696
    %v1802 = vunpack.c.l.b16 %v1697
    %v1803 = vunpack.c.l.b16 %v1698
    %v1804 = vunpack.c.l.b16 %v1699
    %v1805 = vunpack.c.l.b16 %v1700
    %v1806 = vunpack.c.l.b16 %v1701
    %v1807 = vpack.c.b16 %v1768, %v1767
    %v1808 = vpack.c.b16 %v1770, %v1769
    %v1809 = vpack.c.b16 %v1772, %v1771
    %v1810 = vpack.c.b16 %v1774, %v1773
    %v1811 = vpack.c.b16 %v1776, %v1775
    %v1812 = vpack.c.b16 %v1778, %v1777
    %v1813 = vpack.c.b16 %v1780, %v1779
    %v1814 = vpack.c.b16 %v1782, %v1781
    %v1815 = vpack.c.b16 %v1784, %v1783
    %v1816 = vpack.c.b16 %v1786, %v1785
    %v1817 = vpack.c.b16 %v1788, %v1787
    %v1818 = vpack.c.b16 %v1790, %v1789
    %v1819 = vpack.c.b16 %v1792, %v1791
    %v1820 = vpack.c.b16 %v1794, %v1793
    %v1821 = vpack.c.b16 %v1796, %v1795
    %v1822 = vpack.c.b16 %v1798, %v1797
    %v1823 = vpack.c.b16 %v1800, %v1799
    %v1824 = vpack.c.b16 %v1802, %v1801
    %v1825 = vpack.c.b16 %v1804, %v1803
    %v1826 = vpack.c.b16 %v1806, %v1805
    %v1848 = vsel %vm809, %v1724, 0
    %1850 = vmatprep.subr.bf16.mxu0 0
    %1851 = vmatpush1.bf16.msra.mxu0 %v1807
    %1852 = vmatprep.subr.bf16.mxu0 0
    %1853 = vmatpush1.bf16.msra.mxu0 %v1808
    %1854 = vmatprep.subr.bf16.mxu0 0
    %1855 = vmatpush1.bf16.msra.mxu0 %v1809
    %1856 = vmatprep.subr.bf16.mxu0 0
    %1857 = vmatpush1.bf16.msra.mxu0 %v1810
    %1858 = vmatprep.subr.bf16.mxu0 0
    %1859 = vmatpush1.bf16.msra.mxu0 %v1811
    %1860 = vmatprep.subr.bf16.mxu0 0
    %1861 = vmatpush1.bf16.msra.mxu0 %v1812
    %1862 = vmatprep.subr.bf16.mxu0 0
    %1863 = vmatpush1.bf16.msra.mxu0 %v1813
    %1864 = vmatprep.subr.bf16.mxu0 0
    %1865 = vmatpush1.bf16.msra.mxu0 %v1814
    %1866 = vmatprep.subr.bf16.mxu0 0
    %1867 = vmatpush1.bf16.msra.mxu0 %v1815
    %1868 = vmatprep.subr.bf16.mxu0 0
    %1869 = vmatpush1.bf16.msra.mxu0 %v1816
    %1870 = vmatprep.subr.bf16.mxu0 0
    %1871 = vmatpush1.bf16.msra.mxu0 %v1817
    %1872 = vmatprep.subr.bf16.mxu0 0
    %1873 = vmatpush1.bf16.msra.mxu0 %v1818
    %1874 = vmatprep.subr.bf16.mxu0 0
    %1875 = vmatpush1.bf16.msra.mxu0 %v1819
    %1876 = vmatprep.subr.bf16.mxu0 0
    %1877 = vmatpush1.bf16.msra.mxu0 %v1820
    %1878 = vmatprep.subr.bf16.mxu0 0
    %1879 = vmatpush1.bf16.msra.mxu0 %v1821
    %1880 = vmatprep.subr.bf16.mxu0 0
    %1881 = vmatpush1.bf16.msra.mxu0 %v1822
    %1882 = vmatprep.mubr.bf16.mxu0 %v1723
    %1883 = vmatmul.mubr.bf16.gmra.mrb[0].mxu0 %v1716
    %v1884 = vpop.f32.mrb[0].mxu0
    %v1885 = vadd.f32 0.0, %v1884
    %v1886 = vpop.f32.mrb[0].mxu0
    %v1887 = vpop.f32.mrb[0].mxu0
    %v1888 = vpop.f32.mrb[0].mxu0
    %1889 = vdwg.mxu0
    %1890 = vmatprep.subr.bf16.mxu0 0
    %1891 = vmatpush1.bf16.msra.mxu0 %v1823
    %1892 = vmatprep.subr.bf16.mxu0 0
    %1893 = vmatpush1.bf16.msra.mxu0 %v1824
    %1894 = vmatprep.subr.bf16.mxu0 0
    %1895 = vmatpush1.bf16.msra.mxu0 %v1825
    %1896 = vmatprep.subr.bf16.mxu0 0
    %1897 = vmatpush1.bf16.msra.mxu0 %v1826
    %1898 = vmatprep.subr.bf16.mxu0 0
    %1899 = vmatpush1.bf16.msra.mxu0 0
    %1900 = vmatprep.subr.bf16.mxu0 0
    %1901 = vmatpush1.bf16.msra.mxu0 0
    %1902 = vmatprep.subr.bf16.mxu0 0
    %1903 = vmatpush1.bf16.msra.mxu0 0
    %1904 = vmatprep.subr.bf16.mxu0 0
    %1905 = vmatpush1.bf16.msra.mxu0 0
    %1906 = vmatprep.subr.bf16.mxu0 0
    %1907 = vmatpush1.bf16.msra.mxu0 0
    %1908 = vmatprep.subr.bf16.mxu0 0
    %1909 = vmatpush1.bf16.msra.mxu0 0
    %1910 = vmatprep.subr.bf16.mxu0 0
    %1911 = vmatpush1.bf16.msra.mxu0 0
    %1912 = vmatprep.subr.bf16.mxu0 0
    %1913 = vmatpush1.bf16.msra.mxu0 0
    %1914 = vmatprep.subr.bf16.mxu0 0
    %1915 = vmatpush1.bf16.msra.mxu0 0
    %1916 = vmatprep.subr.bf16.mxu0 0
    %1917 = vmatpush1.bf16.msra.mxu0 0
    %1918 = vmatprep.subr.bf16.mxu0 0
    %1919 = vmatpush1.bf16.msra.mxu0 0
    %1920 = vmatprep.subr.bf16.mxu0 0
    %1921 = vmatpush1.bf16.msra.mxu0 0
    %1922 = vmatprep.mubr.bf16.mxu0 0
    %1923 = vmatmul.mubr.bf16.gmra.mrb[0].mxu0 %v1848
    %v1924 = vpop.f32.mrb[0].mxu0
    %v1925 = vadd.f32 %v1885, %v1924
    %v1926 = vpop.f32.mrb[0].mxu0
    %v1927 = vpop.f32.mrb[0].mxu0
    %v1928 = vpop.f32.mrb[0].mxu0
    %1929 = vdwg.mxu0
    %v1930 = vadd.f32 %v1660, %v1925
    %s1931 = scalar_lea.vmem [#allocation8], 800
    %v1932 = vld [vmem:[%s1931] sm:$0xf]
    %v1933 = vld [vmem:[%s1931 + $0x4] sm:$0xf]
    %v1934 = vld [vmem:[%s1931 + $0x8] sm:$0xf]
    %v1935 = vld [vmem:[%s1931 + $0xc] sm:$0xf]
    %v1936 = vld [vmem:[%s1931 + $0x10] sm:$0xf]
    %v1937 = vld [vmem:[%s1931 + $0x14] sm:$0xf]
    %v1938 = vld [vmem:[%s1931 + $0x18] sm:$0xf]
    %v1939 = vld [vmem:[%s1931 + $0x1c] sm:$0xf]
    %v1940 = vld [vmem:[%s1931 + $0x20] sm:$0xf]
    %v1941 = vld [vmem:[%s1931 + $0x24] sm:$0xf]
    %v1942 = vld [vmem:[%s1931 + $0x28] sm:$0xf]
    %v1943 = vld [vmem:[%s1931 + $0x2c] sm:$0xf]
    %v1944 = vld [vmem:[%s1931 + $0x30] sm:$0xf]
    %v1945 = vld [vmem:[%s1931 + $0x34] sm:$0xf]
    %v1946 = vld [vmem:[%s1931 + $0x38] sm:$0xf]
    %v1947 = vld [vmem:[%s1931 + $0x3c] sm:$0xf]
    %v1948 = vld [vmem:[%s1931 + $0x40] sm:$0xf]
    %v1949 = vld [vmem:[%s1931 + $0x44] sm:$0xf]
    %v1950 = vld [vmem:[%s1931 + $0x48] sm:$0xf]
    %v1951 = vld [vmem:[%s1931 + $0x4c] sm:$0xf]
    %v1952 = vld [vmem:[%s1931 + $0x50] sm:$0xf]
    %v1953 = vld [vmem:[%s1931 + $0x54] sm:$0xf]
    %v1954 = vld [vmem:[%s1931 + $0x58] sm:$0xf]
    %v1955 = vld [vmem:[%s1931 + $0x5c] sm:$0xf]
    %v1956 = vld [vmem:[%s1931 + $0x60] sm:$0xf]
    %v1957 = vld [vmem:[%s1931 + $0x64] sm:$0xf]
    %v1958 = vld [vmem:[%s1931 + $0x68] sm:$0xf]
    %v1959 = vld [vmem:[%s1931 + $0x6c] sm:$0xf]
    %v1960 = vld [vmem:[%s1931 + $0x70] sm:$0xf]
    %v1961 = vld [vmem:[%s1931 + $0x74] sm:$0xf]
    %v1962 = vld [vmem:[%s1931 + $0x78] sm:$0xf]
    %v1963 = vld [vmem:[%s1931 + $0x7c] sm:$0xf]
    %v1964 = vld [vmem:[%s1931 + $0x80] sm:$0xf]
    %v1965 = vld [vmem:[%s1931 + $0x84] sm:$0xf]
    %v1966 = vld [vmem:[%s1931 + $0x88] sm:$0xf]
    %v1967 = vld [vmem:[%s1931 + $0x8c] sm:$0xf]
    %v1968 = vld [vmem:[%s1931 + $0x90] sm:$0xf]
    %v1969 = vld [vmem:[%s1931 + $0x94] sm:$0xf]
    %v1970 = vld [vmem:[%s1931 + $0x98] sm:$0xf]
    %v1971 = vld [vmem:[%s1931 + $0x9c] sm:$0xf]
    %v1973 = vunpack.c.l.s4 1966171168
    %v1974 = vunpack.c.0.s8 %v1973
    %v1975 = vlaneseq
    %v1976 = vshrl.u32 %v1975, 7
    %v1977 = vsub.s32 %v1974, %v1976
    %v1978 = vrot.slane %v580, %v1977
    %v1979 = vcombine.high %v1978, %v1978
    %v1981 = vunpack.c.l.s4 1966171168
    %v1982 = vunpack.c.0.s8 %v1981
    %v1983 = vlaneseq
    %v1984 = vshrl.u32 %v1983, 7
    %v1985 = vsub.s32 %v1982, %v1984
    %v1986 = vrot.slane %v1978, %v1985
    %v1988 = vunpack.c.l.s4 1966171168
    %v1989 = vunpack.c.0.s8 %v1988
    %v1990 = vlaneseq
    %v1991 = vshrl.u32 %v1990, 7
    %v1992 = vsub.s32 %v1989, %v1991
    %v1993 = vrot.slane %v1979, %v1992
    %v1994 = vcombine.high %v1986, %v1986
    %v2037 = vunpack.c.l.b16 %v1932
    %v2038 = vunpack.c.l.b16 %v1933
    %v2039 = vunpack.c.l.b16 %v1934
    %v2040 = vunpack.c.l.b16 %v1935
    %v2041 = vunpack.c.l.b16 %v1936
    %v2042 = vunpack.c.l.b16 %v1937
    %v2043 = vunpack.c.l.b16 %v1938
    %v2044 = vunpack.c.l.b16 %v1939
    %v2045 = vunpack.c.l.b16 %v1940
    %v2046 = vunpack.c.l.b16 %v1941
    %v2047 = vunpack.c.l.b16 %v1942
    %v2048 = vunpack.c.l.b16 %v1943
    %v2049 = vunpack.c.l.b16 %v1944
    %v2050 = vunpack.c.l.b16 %v1945
    %v2051 = vunpack.c.l.b16 %v1946
    %v2052 = vunpack.c.l.b16 %v1947
    %v2053 = vunpack.c.l.b16 %v1948
    %v2054 = vunpack.c.l.b16 %v1949
    %v2055 = vunpack.c.l.b16 %v1950
    %v2056 = vunpack.c.l.b16 %v1951
    %v2057 = vunpack.c.l.b16 %v1952
    %v2058 = vunpack.c.l.b16 %v1953
    %v2059 = vunpack.c.l.b16 %v1954
    %v2060 = vunpack.c.l.b16 %v1955
    %v2061 = vunpack.c.l.b16 %v1956
    %v2062 = vunpack.c.l.b16 %v1957
    %v2063 = vunpack.c.l.b16 %v1958
    %v2064 = vunpack.c.l.b16 %v1959
    %v2065 = vunpack.c.l.b16 %v1960
    %v2066 = vunpack.c.l.b16 %v1961
    %v2067 = vunpack.c.l.b16 %v1962
    %v2068 = vunpack.c.l.b16 %v1963
    %v2069 = vunpack.c.l.b16 %v1964
    %v2070 = vunpack.c.l.b16 %v1965
    %v2071 = vunpack.c.l.b16 %v1966
    %v2072 = vunpack.c.l.b16 %v1967
    %v2073 = vunpack.c.l.b16 %v1968
    %v2074 = vunpack.c.l.b16 %v1969
    %v2075 = vunpack.c.l.b16 %v1970
    %v2076 = vunpack.c.l.b16 %v1971
    %v2077 = vpack.c.b16 %v2038, %v2037
    %v2078 = vpack.c.b16 %v2040, %v2039
    %v2079 = vpack.c.b16 %v2042, %v2041
    %v2080 = vpack.c.b16 %v2044, %v2043
    %v2081 = vpack.c.b16 %v2046, %v2045
    %v2082 = vpack.c.b16 %v2048, %v2047
    %v2083 = vpack.c.b16 %v2050, %v2049
    %v2084 = vpack.c.b16 %v2052, %v2051
    %v2085 = vpack.c.b16 %v2054, %v2053
    %v2086 = vpack.c.b16 %v2056, %v2055
    %v2087 = vpack.c.b16 %v2058, %v2057
    %v2088 = vpack.c.b16 %v2060, %v2059
    %v2089 = vpack.c.b16 %v2062, %v2061
    %v2090 = vpack.c.b16 %v2064, %v2063
    %v2091 = vpack.c.b16 %v2066, %v2065
    %v2092 = vpack.c.b16 %v2068, %v2067
    %v2093 = vpack.c.b16 %v2070, %v2069
    %v2094 = vpack.c.b16 %v2072, %v2071
    %v2095 = vpack.c.b16 %v2074, %v2073
    %v2096 = vpack.c.b16 %v2076, %v2075
    %v2118 = vsel %vm809, %v1994, 0
    %2120 = vmatprep.subr.bf16.mxu0 0
    %2121 = vmatpush1.bf16.msra.mxu0 %v2077
    %2122 = vmatprep.subr.bf16.mxu0 0
    %2123 = vmatpush1.bf16.msra.mxu0 %v2078
    %2124 = vmatprep.subr.bf16.mxu0 0
    %2125 = vmatpush1.bf16.msra.mxu0 %v2079
    %2126 = vmatprep.subr.bf16.mxu0 0
    %2127 = vmatpush1.bf16.msra.mxu0 %v2080
    %2128 = vmatprep.subr.bf16.mxu0 0
    %2129 = vmatpush1.bf16.msra.mxu0 %v2081
    %2130 = vmatprep.subr.bf16.mxu0 0
    %2131 = vmatpush1.bf16.msra.mxu0 %v2082
    %2132 = vmatprep.subr.bf16.mxu0 0
    %2133 = vmatpush1.bf16.msra.mxu0 %v2083
    %2134 = vmatprep.subr.bf16.mxu0 0
    %2135 = vmatpush1.bf16.msra.mxu0 %v2084
    %2136 = vmatprep.subr.bf16.mxu0 0
    %2137 = vmatpush1.bf16.msra.mxu0 %v2085
    %2138 = vmatprep.subr.bf16.mxu0 0
    %2139 = vmatpush1.bf16.msra.mxu0 %v2086
    %2140 = vmatprep.subr.bf16.mxu0 0
    %2141 = vmatpush1.bf16.msra.mxu0 %v2087
    %2142 = vmatprep.subr.bf16.mxu0 0
    %2143 = vmatpush1.bf16.msra.mxu0 %v2088
    %2144 = vmatprep.subr.bf16.mxu0 0
    %2145 = vmatpush1.bf16.msra.mxu0 %v2089
    %2146 = vmatprep.subr.bf16.mxu0 0
    %2147 = vmatpush1.bf16.msra.mxu0 %v2090
    %2148 = vmatprep.subr.bf16.mxu0 0
    %2149 = vmatpush1.bf16.msra.mxu0 %v2091
    %2150 = vmatprep.subr.bf16.mxu0 0
    %2151 = vmatpush1.bf16.msra.mxu0 %v2092
    %2152 = vmatprep.mubr.bf16.mxu0 %v1993
    %2153 = vmatmul.mubr.bf16.gmra.mrb[0].mxu0 %v1986
    %v2154 = vpop.f32.mrb[0].mxu0
    %v2155 = vadd.f32 0.0, %v2154
    %v2156 = vpop.f32.mrb[0].mxu0
    %v2157 = vpop.f32.mrb[0].mxu0
    %v2158 = vpop.f32.mrb[0].mxu0
    %2159 = vdwg.mxu0
    %2160 = vmatprep.subr.bf16.mxu0 0
    %2161 = vmatpush1.bf16.msra.mxu0 %v2093
    %2162 = vmatprep.subr.bf16.mxu0 0
    %2163 = vmatpush1.bf16.msra.mxu0 %v2094
    %2164 = vmatprep.subr.bf16.mxu0 0
    %2165 = vmatpush1.bf16.msra.mxu0 %v2095
    %2166 = vmatprep.subr.bf16.mxu0 0
    %2167 = vmatpush1.bf16.msra.mxu0 %v2096
    %2168 = vmatprep.subr.bf16.mxu0 0
    %2169 = vmatpush1.bf16.msra.mxu0 0
    %2170 = vmatprep.subr.bf16.mxu0 0
    %2171 = vmatpush1.bf16.msra.mxu0 0
    %2172 = vmatprep.subr.bf16.mxu0 0
    %2173 = vmatpush1.bf16.msra.mxu0 0
    %2174 = vmatprep.subr.bf16.mxu0 0
    %2175 = vmatpush1.bf16.msra.mxu0 0
    %2176 = vmatprep.subr.bf16.mxu0 0
    %2177 = vmatpush1.bf16.msra.mxu0 0
    %2178 = vmatprep.subr.bf16.mxu0 0
    %2179 = vmatpush1.bf16.msra.mxu0 0
    %2180 = vmatprep.subr.bf16.mxu0 0
    %2181 = vmatpush1.bf16.msra.mxu0 0
    %2182 = vmatprep.subr.bf16.mxu0 0
    %2183 = vmatpush1.bf16.msra.mxu0 0
    %2184 = vmatprep.subr.bf16.mxu0 0
    %2185 = vmatpush1.bf16.msra.mxu0 0
    %2186 = vmatprep.subr.bf16.mxu0 0
    %2187 = vmatpush1.bf16.msra.mxu0 0
    %2188 = vmatprep.subr.bf16.mxu0 0
    %2189 = vmatpush1.bf16.msra.mxu0 0
    %2190 = vmatprep.subr.bf16.mxu0 0
    %2191 = vmatpush1.bf16.msra.mxu0 0
    %2192 = vmatprep.mubr.bf16.mxu0 0
    %2193 = vmatmul.mubr.bf16.gmra.mrb[0].mxu0 %v2118
    %v2194 = vpop.f32.mrb[0].mxu0
    %v2195 = vadd.f32 %v2155, %v2194
    %v2196 = vpop.f32.mrb[0].mxu0
    %v2197 = vpop.f32.mrb[0].mxu0
    %v2198 = vpop.f32.mrb[0].mxu0
    %2199 = vdwg.mxu0
    %v2200 = vadd.f32 %v1930, %v2195
    %v2201 = vld [vmem:[#allocation10] sm:$0xf]
    %v2202 = vlaneseq
    %v2203 = vshrl.u32 %v2202, 7
    %v2204 = vsub.s32 0, %v2203
    %v2205 = vrot.slane %v2201, %v2204
    %v2206 = vadd.f32 %v2200, %v2205
    %v2207 = vmax.f32 %v2206, 0.0
    %v2208 = vlaneseq
    %v2209 = vshrl.u32 %v2208, 7
    %v2210 = vsub.s32 1, %v2209
    %v2211 = vrot.slane %v2201, %v2210
    %v2212 = vmul.f32 %v2207, %v2211
    %v2213 = vlaneseq
    %v2214 = vshrl.u32 %v2213, 7
    %v2215 = vsub.s32 2, %v2214
    %v2216 = vrot.slane %v2201, %v2215
    %v2217 = vadd.f32 %v2212, %v2216
    %v2218 = vpack.c.bf16 %v2217, %v2217
    %v2219 = vld [vmem:[#allocation11] sm:$0xf]
    %v2220 = vld [vmem:[#allocation11 + $0x4] sm:$0xf]
    %v2221 = vld [vmem:[#allocation11 + $0x8] sm:$0xf]
    %v2222 = vld [vmem:[#allocation11 + $0xc] sm:$0xf]
    %v2223 = vld [vmem:[#allocation11 + $0x10] sm:$0xf]
    %v2224 = vld [vmem:[#allocation11 + $0x14] sm:$0xf]
    %v2225 = vld [vmem:[#allocation11 + $0x18] sm:$0xf]
    %v2226 = vld [vmem:[#allocation11 + $0x1c] sm:$0xf]
    %v2227 = vld [vmem:[#allocation11 + $0x20] sm:$0xf]
    %v2228 = vld [vmem:[#allocation11 + $0x24] sm:$0xf]
    %v2229 = vld [vmem:[#allocation11 + $0x28] sm:$0xf]
    %v2230 = vld [vmem:[#allocation11 + $0x2c] sm:$0xf]
    %v2231 = vld [vmem:[#allocation11 + $0x30] sm:$0xf]
    %v2232 = vld [vmem:[#allocation11 + $0x34] sm:$0xf]
    %v2233 = vld [vmem:[#allocation11 + $0x38] sm:$0xf]
    %v2234 = vld [vmem:[#allocation11 + $0x3c] sm:$0xf]
    %v2235 = vlaneseq
    %v2236 = vshrl.u32 %v2235, 7
    %v2237 = vsub.s32 3, %v2236
    %v2238 = vrot.slane %v2201, %v2237
    %v2255 = vunpack.c.l.b16 %v2219
    %v2256 = vunpack.c.l.b16 %v2220
    %v2257 = vunpack.c.l.b16 %v2221
    %v2258 = vunpack.c.l.b16 %v2222
    %v2259 = vunpack.c.l.b16 %v2223
    %v2260 = vunpack.c.l.b16 %v2224
    %v2261 = vunpack.c.l.b16 %v2225
    %v2262 = vunpack.c.l.b16 %v2226
    %v2263 = vunpack.c.l.b16 %v2227
    %v2264 = vunpack.c.l.b16 %v2228
    %v2265 = vunpack.c.l.b16 %v2229
    %v2266 = vunpack.c.l.b16 %v2230
    %v2267 = vunpack.c.l.b16 %v2231
    %v2268 = vunpack.c.l.b16 %v2232
    %v2269 = vunpack.c.l.b16 %v2233
    %v2270 = vunpack.c.l.b16 %v2234
    %v2271 = vpack.c.b16 %v2256, %v2255
    %v2272 = vpack.c.b16 %v2258, %v2257
    %v2273 = vpack.c.b16 %v2260, %v2259
    %v2274 = vpack.c.b16 %v2262, %v2261
    %v2275 = vpack.c.b16 %v2264, %v2263
    %v2276 = vpack.c.b16 %v2266, %v2265
    %v2277 = vpack.c.b16 %v2268, %v2267
    %v2278 = vpack.c.b16 %v2270, %v2269
    %2287 = vmatprep.subr.bf16.mxu0 0
    %2288 = vmatpush1.bf16.msra.mxu0 %v2271
    %2289 = vmatprep.subr.bf16.mxu0 0
    %2290 = vmatpush1.bf16.msra.mxu0 %v2272
    %2291 = vmatprep.subr.bf16.mxu0 0
    %2292 = vmatpush1.bf16.msra.mxu0 %v2273
    %2293 = vmatprep.subr.bf16.mxu0 0
    %2294 = vmatpush1.bf16.msra.mxu0 %v2274
    %2295 = vmatprep.subr.bf16.mxu0 0
    %2296 = vmatpush1.bf16.msra.mxu0 %v2275
    %2297 = vmatprep.subr.bf16.mxu0 0
    %2298 = vmatpush1.bf16.msra.mxu0 %v2276
    %2299 = vmatprep.subr.bf16.mxu0 0
    %2300 = vmatpush1.bf16.msra.mxu0 %v2277
    %2301 = vmatprep.subr.bf16.mxu0 0
    %2302 = vmatpush1.bf16.msra.mxu0 %v2278
    %2303 = vmatprep.subr.bf16.mxu0 0
    %2304 = vmatpush1.bf16.msra.mxu0 0
    %2305 = vmatprep.subr.bf16.mxu0 0
    %2306 = vmatpush1.bf16.msra.mxu0 0
    %2307 = vmatprep.subr.bf16.mxu0 0
    %2308 = vmatpush1.bf16.msra.mxu0 0
    %2309 = vmatprep.subr.bf16.mxu0 0
    %2310 = vmatpush1.bf16.msra.mxu0 0
    %2311 = vmatprep.subr.bf16.mxu0 0
    %2312 = vmatpush1.bf16.msra.mxu0 0
    %2313 = vmatprep.subr.bf16.mxu0 0
    %2314 = vmatpush1.bf16.msra.mxu0 0
    %2315 = vmatprep.subr.bf16.mxu0 0
    %2316 = vmatpush1.bf16.msra.mxu0 0
    %2317 = vmatprep.subr.bf16.mxu0 0
    %2318 = vmatpush1.bf16.msra.mxu0 0
    %2319 = vmatprep.mubr.bf16.mxu0 0
    %2320 = vmatmul.mubr.bf16.gmra.mrb[0].mxu0 %v2218
    %v2321 = vpop.f32.mrb[0].mxu0
    %v2322 = vadd.f32 %v2238, %v2321
    %v2323 = vpop.f32.mrb[0].mxu0
    %v2324 = vpop.f32.mrb[0].mxu0
    %v2325 = vpop.f32.mrb[0].mxu0
    %2326 = vdwg.mxu0
    %v2327 = vxor.u32 %v2322, 2147483648
    %v2328 = vmul.f32 %v2327, 1.442695
    %v2329 = vpow.pop %v2328
    %v2330 = vadd.f32 %v2329, 1.0
    %v2331 = vrcp.pop %v2330
    %v2332 = vmul.f32 1.0, %v2331
    %2333 = vst [vmem:[#allocation13] sm:$0x3] %v2332
    // Predicated region
    $region50: #{tpu_custom_call.1} parent=1 // pred_check
      _
    $region51: #{tpu_custom_call.1} parent=1 // pred_check_branch
      %2335 = sbr.rel (0) target = $region53
    $region52: #{tpu_custom_call.1} parent=1 // pred_region
      %s2337 = ssub.s32 32, 32
      %2338 = vsyncadd [#allocation4], %s2337
      %s2340 = sshll.u32 [#allocation13], 4
      %s2341 = int_to_ptr.vmem [resolvable:$true] %s2340
      %2343 = dma.vmem_to_hbm [thread:$0]  %s2341, 32, %s6, [#allocation4]
    $region53: #{tpu_custom_call.1} parent=1 // pred_fallthru
      _
    // Predicated region
    $region54: #{tpu_custom_call.1} parent=1 // pred_check
      _
    $region55: #{tpu_custom_call.1} parent=1 // pred_check_branch
      %2345 = sbr.rel (0) target = $region57
    $region56: #{tpu_custom_call.1} parent=1 // pred_region
      %2346 = dma.done [#allocation4], 32
    $region57: #{tpu_custom_call.1} parent=1 // pred_fallthru
      _
    %2347 = vsyncpa [#allocation3], 1
    %2348 = vsyncpa [#allocation6], 1
    %2349 = vsyncpa [#allocation9], 1
    %2350 = vsyncpa [#allocation12], 1
    %2351 = vsyncpa [#allocation4], 1

</llo_original>
